<compile_context>
chip_gen: v5e
topology: v5e:2x2
jax: 0.10.0
libtpu: 0.0.40
codegen_flags: <defaults>
</compile_context>

<pallas_src>
import functools

import jax
import jax.numpy as jnp
from jax.experimental import pallas as pl
from jax.experimental.pallas import tpu as pltpu

LATENT_DIM = 16
STYLE_DIM = 64
NUM_DOMAINS = 2
HIDDEN = 256
HIDDEN2 = 128


# ---------------------------------------------------------------------------
# Kernel body
# ---------------------------------------------------------------------------
def _make_kernel(num_domains, style_dim):
    D = num_domains

    def kernel(z_ref, y_ref, w_ref, b_ref, out_ref):
        # One fused linear layer: bf16 x bf16 on the MXU with f32 accumulation,
        # bias add + ReLU in f32 on the VPU. Slab k holds both W_k and bias_k.
        def linear(x, k, relu):
            acc = jnp.dot(x.astype(jnp.bfloat16), w_ref[k],
                          preferred_element_type=jnp.float32)
            acc = acc + b_ref[k:k + 1, :]
            return jnp.maximum(acc, 0.0) if relu else acc

        # Shared trunk: Linear(latent,256)+ReLU, then 3 x (Linear(256,256)+ReLU).
        # z is zero-padded to 256 lanes; slab 0 rows >= latent_dim are zero.
        h = z_ref[...]                                   # f32 (bm, 256)
        for k in range(4):
            h = linear(h, k, relu=True)

        # Per-domain unshared heads + in-kernel domain selection.
        yv = y_ref[...]                                  # int32 (bm, 1)
        out = None
        for d in range(D):
            base = 4 + 3 * d
            t = linear(h, base + 0, relu=True)           # (bm, 256)
            t = linear(t, base + 1, relu=True)           # (bm, 256), cols>=128 are 0
            sd = linear(t, base + 2, relu=False)[:, :style_dim]   # (bm, 64)
            out = sd if out is None else jnp.where(yv == d, sd, out)
        out_ref[...] = out                               # (bm, style_dim) f32

    return kernel


# ---------------------------------------------------------------------------
# Parameter init (nn.Linear style) and one-time packing into 2 fused buffers
# ---------------------------------------------------------------------------
def init_params(key, latent_dim=LATENT_DIM, style_dim=STYLE_DIM,
                num_domains=NUM_DOMAINS):
    """nn.Linear-style init (uniform +-1/sqrt(fan_in)).

    Returns a list of (w, b) pairs, w stored as (in, out), b as (out,),
    ordered: 4 shared layers, then for each domain [L(256,256), L(256,128),
    L(128, style_dim)].
    """
    dims = [(latent_dim, HIDDEN), (HIDDEN, HIDDEN), (HIDDEN, HIDDEN),
            (HIDDEN, HIDDEN)]
    for _ in range(num_domains):
        dims += [(HIDDEN, HIDDEN), (HIDDEN, HIDDEN2), (HIDDEN2, style_dim)]

    keys = jax.random.split(key, 2 * len(dims))
    params = []
    for i, (fan_in, fan_out) in enumerate(dims):
        bound = 1.0 / (fan_in ** 0.5)
        w = jax.random.uniform(keys[2 * i], (fan_in, fan_out),
                               jnp.float32, -bound, bound)
        b = jax.random.uniform(keys[2 * i + 1], (fan_out,),
                               jnp.float32, -bound, bound)
        params.append((w, b))
    return params


def pack_params(params, num_domains=NUM_DOMAINS):
    """Pack every layer into one stacked bf16 weight slab + one f32 bias slab.

    Weight slab : (4 + 3*D, 256, 256) bf16, each layer zero-padded to 256x256.
    Bias slab   : (round_up(4+3*D, 8), 256) f32, zero-padded per row.
    Run ONCE and keep device-resident; the forward pass then needs 4 DMAs.
    """
    D = num_domains
    n_slabs = 4 + 3 * D
    b_rows = ((n_slabs + 7) // 8) * 8

    W = jnp.zeros((n_slabs, HIDDEN, HIDDEN), jnp.float32)
    biases = jnp.zeros((b_rows, HIDDEN), jnp.float32)

    def put(slab, w, b, W, biases):
        W = W.at[slab, :w.shape[0], :w.shape[1]].set(w)
        biases = biases.at[slab, :b.shape[0]].set(b)
        return W, biases

    for k in range(4):                                   # shared trunk
        W, biases = put(k, params[k][0], params[k][1], W, biases)
    for d in range(D):                                   # unshared heads
        head = params[4 + 3 * d: 4 + 3 * (d + 1)]
        for j in range(3):
            W, biases = put(4 + 3 * d + j, head[j][0], head[j][1], W, biases)

    return W.astype(jnp.bfloat16), biases


# ---------------------------------------------------------------------------
# Forward pass
# ---------------------------------------------------------------------------
@functools.partial(jax.jit, static_argnames=("num_domains",))
def mapping_network_forward(z, y, packed, num_domains=NUM_DOMAINS):
    """z: (B, latent_dim) f32, y: (B,) int -> s: (B, STYLE_DIM) f32."""
    W, biases = packed
    B, latent_dim = z.shape
    D = num_domains
    K = W.shape[1]                                       # 256 slab side

    # Batch tiling: pad to a sublane multiple; split batches > 8 rows into at
    # least two tiles (cap 128) so the parallel grid axis can shard across the
    # two v7x TensorCores.
    B8 = ((B + 7) // 8) * 8
    half = ((B8 // 2) + 7) // 8 * 8 if B8 > 8 else B8
    bm = max(8, min(128, half))
    Bp = ((B8 + bm - 1) // bm) * bm
    grid_m = Bp // bm

    # Lane-dense z tile (latent 16 -> 256 zero-padded) and per-row domain ids.
    z_p = jnp.zeros((Bp, K), jnp.float32).at[:B, :latent_dim].set(
        z.astype(jnp.float32))
    y_p = jnp.zeros((Bp, 1), jnp.int32).at[:B, 0].set(y.astype(jnp.int32))

    flops = 2 * Bp * (latent_dim * HIDDEN + 3 * HIDDEN * HIDDEN
                      + D * (HIDDEN * HIDDEN + HIDDEN * HIDDEN2
                             + HIDDEN2 * STYLE_DIM))
    bytes_accessed = (W.size * 2 + biases.size * 4 + Bp * K * 4 + Bp * 4
                      + Bp * STYLE_DIM * 4)

    const2 = lambda i: (0, 0)
    const3 = lambda i: (0, 0, 0)
    out = pl.pallas_call(
        _make_kernel(D, STYLE_DIM),
        out_shape=jax.ShapeDtypeStruct((Bp, STYLE_DIM), jnp.float32),
        grid=(grid_m,),
        in_specs=[
            pl.BlockSpec((bm, K), lambda i: (i, 0)),     # z tile
            pl.BlockSpec((bm, 1), lambda i: (i, 0)),     # per-row domain id
            pl.BlockSpec(W.shape, const3),               # weights: VMEM-resident
            pl.BlockSpec(biases.shape, const2),          # biases : VMEM-resident
        ],
        out_specs=pl.BlockSpec((bm, STYLE_DIM), lambda i: (i, 0)),
        compiler_params=pltpu.CompilerParams(
            dimension_semantics=("parallel",)),
        cost_estimate=pl.CostEstimate(flops=flops, transcendentals=0,
                                      bytes_accessed=bytes_accessed),
    )(z_p, y_p, W, biases)

    # Kernel already did the domain selection; just drop the padded rows.
    return out[:B]


# ---------------------------------------------------------------------------
# Pure-JAX f32 reference (mirrors the PyTorch forward)
# ---------------------------------------------------------------------------
def mapping_network_reference(z, y, params, num_domains=NUM_DOMAINS):
    def lin(x, w, b, relu):
        o = x @ w + b
        return jnp.maximum(o, 0.0) if relu else o

    h = z.astype(jnp.float32)
    for i in range(4):
        h = lin(h, params[i][0], params[i][1], True)
    outs = []
    for d in range(num_domains):
        p = params[4 + 3 * d: 4 + 3 * (d + 1)]
        t = lin(h, p[0][0], p[0][1], True)
        t = lin(t, p[1][0], p[1][1], True)
        outs.append(lin(t, p[2][0], p[2][1], False))
    out = jnp.stack(outs, axis=1)                 # (B, num_domains, style_dim)
    return out[jnp.arange(z.shape[0]), y]


if __name__ == "__main__":
    key = jax.random.PRNGKey(0)
    k_params, k_z, k_y = jax.random.split(key, 3)

    params = init_params(k_params)
    packed = jax.device_put(pack_params(params))   # pack + bf16-cast once

    # Small case (single grid step).
    B = 2
    z = jax.random.normal(k_z, (B, LATENT_DIM), jnp.float32)
    y = jax.random.randint(k_y, (B,), 0, NUM_DOMAINS, jnp.int32)
    s = jax.block_until_ready(mapping_network_forward(z, y, packed))
    s_ref = mapping_network_reference(z, y, params)
    assert s.shape == (B, STYLE_DIM)
    # Kernel weights are bf16 (f32 accumulation) -> bf16-appropriate tolerance.
    assert jnp.allclose(s, s_ref, atol=5e-2, rtol=5e-2), "mismatch vs reference"

    # Also exercise the multi-tile (grid > 1, per-core shardable) path.
    B2 = 16
    z2 = jax.random.normal(jax.random.PRNGKey(1), (B2, LATENT_DIM), jnp.float32)
    y2 = jax.random.randint(jax.random.PRNGKey(2), (B2,), 0, NUM_DOMAINS,
                            jnp.int32)
    s2 = jax.block_until_ready(mapping_network_forward(z2, y2, packed))
    s2_ref = mapping_network_reference(z2, y2, params)
    assert jnp.allclose(s2, s2_ref, atol=5e-2, rtol=5e-2), "mismatch (tiled)"

    print("KERNEL_OK")
</pallas_src>

<mosaic_0001>
module attributes {stable_mosaic.version = 11 : i64} {
  func.func @kernel(%arg0: i32, %arg1: memref<8x256xf32, #tpu.memory_space<vmem>>, %arg2: memref<8x1xi32, #tpu.memory_space<vmem>>, %arg3: memref<10x256x256xbf16, #tpu.memory_space<vmem>>, %arg4: memref<16x256xf32, #tpu.memory_space<vmem>>, %arg5: memref<8x64xf32, #tpu.memory_space<vmem>>) attributes {dimension_semantics = [#tpu.dimension_semantics<parallel>], iteration_bounds = array<i64: 1>, scalar_prefetch = 0 : i64, scratch_operands = 0 : i64, tpu.core_type = #tpu.core_type<tc>, window_params = [{transform_indices = @transform_0, window_bounds = array<i64: 8, 256>}, {transform_indices = @transform_1, window_bounds = array<i64: 8, 1>}, {pipeline_mode = #tpu.pipeline_mode<synchronous>, transform_indices = @transform_2, window_bounds = array<i64: 10, 256, 256>}, {pipeline_mode = #tpu.pipeline_mode<synchronous>, transform_indices = @transform_3, window_bounds = array<i64: 16, 256>}, {transform_indices = @transform_4, window_bounds = array<i64: 8, 64>}]} {
    %c0 = arith.constant 0 : index
    %c0_0 = arith.constant 0 : index
    %0 = vector.load %arg1[%c0, %c0_0] : memref<8x256xf32, #tpu.memory_space<vmem>>, vector<8x256xf32>
    %1 = arith.truncf %0 : vector<8x256xf32> to vector<8x256xbf16>
    %c0_1 = arith.constant 0 : index
    %c0_2 = arith.constant 0 : index
    %c0_3 = arith.constant 0 : index
    %2 = vector.load %arg3[%c0_1, %c0_2, %c0_3] : memref<10x256x256xbf16, #tpu.memory_space<vmem>>, vector<1x256x256xbf16>
    %3 = vector.shape_cast %2 : vector<1x256x256xbf16> to vector<256x256xbf16>
    %cst = arith.constant dense<0.000000e+00> : vector<8x256xf32>
    %4 = tpu.matmul %1, %3, %cst {dimension_numbers = #tpu.dot_dimension_numbers<[1], [0], [0], [1], [0, 0, 1, 1], [], []>} : vector<8x256xbf16>, vector<256x256xbf16>, vector<8x256xf32> -> vector<8x256xf32>
    %c0_4 = arith.constant 0 : index
    %c0_5 = arith.constant 0 : index
    %5 = vector.load %arg4[%c0_4, %c0_5] : memref<16x256xf32, #tpu.memory_space<vmem>>, vector<1x256xf32>
    %6 = vector.broadcast %5 : vector<1x256xf32> to vector<8x256xf32>
    %7 = arith.addf %4, %6 : vector<8x256xf32>
    %cst_6 = arith.constant 0.000000e+00 : f32
    %8 = vector.broadcast %cst_6 : f32 to vector<8x256xf32>
    %9 = arith.maximumf %7, %8 : vector<8x256xf32>
    %10 = arith.truncf %9 : vector<8x256xf32> to vector<8x256xbf16>
    %c1 = arith.constant 1 : index
    %c0_7 = arith.constant 0 : index
    %c0_8 = arith.constant 0 : index
    %11 = vector.load %arg3[%c1, %c0_7, %c0_8] : memref<10x256x256xbf16, #tpu.memory_space<vmem>>, vector<1x256x256xbf16>
    %12 = vector.shape_cast %11 : vector<1x256x256xbf16> to vector<256x256xbf16>
    %cst_9 = arith.constant dense<0.000000e+00> : vector<8x256xf32>
    %13 = tpu.matmul %10, %12, %cst_9 {dimension_numbers = #tpu.dot_dimension_numbers<[1], [0], [0], [1], [0, 0, 1, 1], [], []>} : vector<8x256xbf16>, vector<256x256xbf16>, vector<8x256xf32> -> vector<8x256xf32>
    %c1_10 = arith.constant 1 : index
    %c0_11 = arith.constant 0 : index
    %14 = vector.load %arg4[%c1_10, %c0_11] : memref<16x256xf32, #tpu.memory_space<vmem>>, vector<1x256xf32>
    %15 = vector.broadcast %14 : vector<1x256xf32> to vector<8x256xf32>
    %16 = arith.addf %13, %15 : vector<8x256xf32>
    %cst_12 = arith.constant 0.000000e+00 : f32
    %17 = vector.broadcast %cst_12 : f32 to vector<8x256xf32>
    %18 = arith.maximumf %16, %17 : vector<8x256xf32>
    %19 = arith.truncf %18 : vector<8x256xf32> to vector<8x256xbf16>
    %c2 = arith.constant 2 : index
    %c0_13 = arith.constant 0 : index
    %c0_14 = arith.constant 0 : index
    %20 = vector.load %arg3[%c2, %c0_13, %c0_14] : memref<10x256x256xbf16, #tpu.memory_space<vmem>>, vector<1x256x256xbf16>
    %21 = vector.shape_cast %20 : vector<1x256x256xbf16> to vector<256x256xbf16>
    %cst_15 = arith.constant dense<0.000000e+00> : vector<8x256xf32>
    %22 = tpu.matmul %19, %21, %cst_15 {dimension_numbers = #tpu.dot_dimension_numbers<[1], [0], [0], [1], [0, 0, 1, 1], [], []>} : vector<8x256xbf16>, vector<256x256xbf16>, vector<8x256xf32> -> vector<8x256xf32>
    %c2_16 = arith.constant 2 : index
    %c0_17 = arith.constant 0 : index
    %23 = vector.load %arg4[%c2_16, %c0_17] : memref<16x256xf32, #tpu.memory_space<vmem>>, vector<1x256xf32>
    %24 = vector.broadcast %23 : vector<1x256xf32> to vector<8x256xf32>
    %25 = arith.addf %22, %24 : vector<8x256xf32>
    %cst_18 = arith.constant 0.000000e+00 : f32
    %26 = vector.broadcast %cst_18 : f32 to vector<8x256xf32>
    %27 = arith.maximumf %25, %26 : vector<8x256xf32>
    %28 = arith.truncf %27 : vector<8x256xf32> to vector<8x256xbf16>
    %c3 = arith.constant 3 : index
    %c0_19 = arith.constant 0 : index
    %c0_20 = arith.constant 0 : index
    %29 = vector.load %arg3[%c3, %c0_19, %c0_20] : memref<10x256x256xbf16, #tpu.memory_space<vmem>>, vector<1x256x256xbf16>
    %30 = vector.shape_cast %29 : vector<1x256x256xbf16> to vector<256x256xbf16>
    %cst_21 = arith.constant dense<0.000000e+00> : vector<8x256xf32>
    %31 = tpu.matmul %28, %30, %cst_21 {dimension_numbers = #tpu.dot_dimension_numbers<[1], [0], [0], [1], [0, 0, 1, 1], [], []>} : vector<8x256xbf16>, vector<256x256xbf16>, vector<8x256xf32> -> vector<8x256xf32>
    %c3_22 = arith.constant 3 : index
    %c0_23 = arith.constant 0 : index
    %32 = vector.load %arg4[%c3_22, %c0_23] : memref<16x256xf32, #tpu.memory_space<vmem>>, vector<1x256xf32>
    %33 = vector.broadcast %32 : vector<1x256xf32> to vector<8x256xf32>
    %34 = arith.addf %31, %33 : vector<8x256xf32>
    %cst_24 = arith.constant 0.000000e+00 : f32
    %35 = vector.broadcast %cst_24 : f32 to vector<8x256xf32>
    %36 = arith.maximumf %34, %35 : vector<8x256xf32>
    %c0_25 = arith.constant 0 : index
    %c0_26 = arith.constant 0 : index
    %37 = vector.load %arg2[%c0_25, %c0_26] : memref<8x1xi32, #tpu.memory_space<vmem>>, vector<8x1xi32>
    %38 = arith.truncf %36 : vector<8x256xf32> to vector<8x256xbf16>
    %c4 = arith.constant 4 : index
    %c0_27 = arith.constant 0 : index
    %c0_28 = arith.constant 0 : index
    %39 = vector.load %arg3[%c4, %c0_27, %c0_28] : memref<10x256x256xbf16, #tpu.memory_space<vmem>>, vector<1x256x256xbf16>
    %40 = vector.shape_cast %39 : vector<1x256x256xbf16> to vector<256x256xbf16>
    %cst_29 = arith.constant dense<0.000000e+00> : vector<8x256xf32>
    %41 = tpu.matmul %38, %40, %cst_29 {dimension_numbers = #tpu.dot_dimension_numbers<[1], [0], [0], [1], [0, 0, 1, 1], [], []>} : vector<8x256xbf16>, vector<256x256xbf16>, vector<8x256xf32> -> vector<8x256xf32>
    %c4_30 = arith.constant 4 : index
    %c0_31 = arith.constant 0 : index
    %42 = vector.load %arg4[%c4_30, %c0_31] : memref<16x256xf32, #tpu.memory_space<vmem>>, vector<1x256xf32>
    %43 = vector.broadcast %42 : vector<1x256xf32> to vector<8x256xf32>
    %44 = arith.addf %41, %43 : vector<8x256xf32>
    %cst_32 = arith.constant 0.000000e+00 : f32
    %45 = vector.broadcast %cst_32 : f32 to vector<8x256xf32>
    %46 = arith.maximumf %44, %45 : vector<8x256xf32>
    %47 = arith.truncf %46 : vector<8x256xf32> to vector<8x256xbf16>
    %c5 = arith.constant 5 : index
    %c0_33 = arith.constant 0 : index
    %c0_34 = arith.constant 0 : index
    %48 = vector.load %arg3[%c5, %c0_33, %c0_34] : memref<10x256x256xbf16, #tpu.memory_space<vmem>>, vector<1x256x256xbf16>
    %49 = vector.shape_cast %48 : vector<1x256x256xbf16> to vector<256x256xbf16>
    %cst_35 = arith.constant dense<0.000000e+00> : vector<8x256xf32>
    %50 = tpu.matmul %47, %49, %cst_35 {dimension_numbers = #tpu.dot_dimension_numbers<[1], [0], [0], [1], [0, 0, 1, 1], [], []>} : vector<8x256xbf16>, vector<256x256xbf16>, vector<8x256xf32> -> vector<8x256xf32>
    %c5_36 = arith.constant 5 : index
    %c0_37 = arith.constant 0 : index
    %51 = vector.load %arg4[%c5_36, %c0_37] : memref<16x256xf32, #tpu.memory_space<vmem>>, vector<1x256xf32>
    %52 = vector.broadcast %51 : vector<1x256xf32> to vector<8x256xf32>
    %53 = arith.addf %50, %52 : vector<8x256xf32>
    %cst_38 = arith.constant 0.000000e+00 : f32
    %54 = vector.broadcast %cst_38 : f32 to vector<8x256xf32>
    %55 = arith.maximumf %53, %54 : vector<8x256xf32>
    %56 = arith.truncf %55 : vector<8x256xf32> to vector<8x256xbf16>
    %c6 = arith.constant 6 : index
    %c0_39 = arith.constant 0 : index
    %c0_40 = arith.constant 0 : index
    %57 = vector.load %arg3[%c6, %c0_39, %c0_40] : memref<10x256x256xbf16, #tpu.memory_space<vmem>>, vector<1x256x256xbf16>
    %58 = vector.shape_cast %57 : vector<1x256x256xbf16> to vector<256x256xbf16>
    %cst_41 = arith.constant dense<0.000000e+00> : vector<8x256xf32>
    %59 = tpu.matmul %56, %58, %cst_41 {dimension_numbers = #tpu.dot_dimension_numbers<[1], [0], [0], [1], [0, 0, 1, 1], [], []>} : vector<8x256xbf16>, vector<256x256xbf16>, vector<8x256xf32> -> vector<8x256xf32>
    %c6_42 = arith.constant 6 : index
    %c0_43 = arith.constant 0 : index
    %60 = vector.load %arg4[%c6_42, %c0_43] : memref<16x256xf32, #tpu.memory_space<vmem>>, vector<1x256xf32>
    %61 = vector.broadcast %60 : vector<1x256xf32> to vector<8x256xf32>
    %62 = arith.addf %59, %61 : vector<8x256xf32>
    %63 = vector.extract_strided_slice %62 {offsets = [0, 0], sizes = [8, 64], strides = [1, 1]} : vector<8x256xf32> to vector<8x64xf32>
    %64 = arith.truncf %36 : vector<8x256xf32> to vector<8x256xbf16>
    %c7 = arith.constant 7 : index
    %c0_44 = arith.constant 0 : index
    %c0_45 = arith.constant 0 : index
    %65 = vector.load %arg3[%c7, %c0_44, %c0_45] : memref<10x256x256xbf16, #tpu.memory_space<vmem>>, vector<1x256x256xbf16>
    %66 = vector.shape_cast %65 : vector<1x256x256xbf16> to vector<256x256xbf16>
    %cst_46 = arith.constant dense<0.000000e+00> : vector<8x256xf32>
    %67 = tpu.matmul %64, %66, %cst_46 {dimension_numbers = #tpu.dot_dimension_numbers<[1], [0], [0], [1], [0, 0, 1, 1], [], []>} : vector<8x256xbf16>, vector<256x256xbf16>, vector<8x256xf32> -> vector<8x256xf32>
    %c7_47 = arith.constant 7 : index
    %c0_48 = arith.constant 0 : index
    %68 = vector.load %arg4[%c7_47, %c0_48] : memref<16x256xf32, #tpu.memory_space<vmem>>, vector<1x256xf32>
    %69 = vector.broadcast %68 : vector<1x256xf32> to vector<8x256xf32>
    %70 = arith.addf %67, %69 : vector<8x256xf32>
    %cst_49 = arith.constant 0.000000e+00 : f32
    %71 = vector.broadcast %cst_49 : f32 to vector<8x256xf32>
    %72 = arith.maximumf %70, %71 : vector<8x256xf32>
    %73 = arith.truncf %72 : vector<8x256xf32> to vector<8x256xbf16>
    %c8 = arith.constant 8 : index
    %c0_50 = arith.constant 0 : index
    %c0_51 = arith.constant 0 : index
    %74 = vector.load %arg3[%c8, %c0_50, %c0_51] : memref<10x256x256xbf16, #tpu.memory_space<vmem>>, vector<1x256x256xbf16>
    %75 = vector.shape_cast %74 : vector<1x256x256xbf16> to vector<256x256xbf16>
    %cst_52 = arith.constant dense<0.000000e+00> : vector<8x256xf32>
    %76 = tpu.matmul %73, %75, %cst_52 {dimension_numbers = #tpu.dot_dimension_numbers<[1], [0], [0], [1], [0, 0, 1, 1], [], []>} : vector<8x256xbf16>, vector<256x256xbf16>, vector<8x256xf32> -> vector<8x256xf32>
    %c8_53 = arith.constant 8 : index
    %c0_54 = arith.constant 0 : index
    %77 = vector.load %arg4[%c8_53, %c0_54] : memref<16x256xf32, #tpu.memory_space<vmem>>, vector<1x256xf32>
    %78 = vector.broadcast %77 : vector<1x256xf32> to vector<8x256xf32>
    %79 = arith.addf %76, %78 : vector<8x256xf32>
    %cst_55 = arith.constant 0.000000e+00 : f32
    %80 = vector.broadcast %cst_55 : f32 to vector<8x256xf32>
    %81 = arith.maximumf %79, %80 : vector<8x256xf32>
    %82 = arith.truncf %81 : vector<8x256xf32> to vector<8x256xbf16>
    %c9 = arith.constant 9 : index
    %c0_56 = arith.constant 0 : index
    %c0_57 = arith.constant 0 : index
    %83 = vector.load %arg3[%c9, %c0_56, %c0_57] : memref<10x256x256xbf16, #tpu.memory_space<vmem>>, vector<1x256x256xbf16>
    %84 = vector.shape_cast %83 : vector<1x256x256xbf16> to vector<256x256xbf16>
    %cst_58 = arith.constant dense<0.000000e+00> : vector<8x256xf32>
    %85 = tpu.matmul %82, %84, %cst_58 {dimension_numbers = #tpu.dot_dimension_numbers<[1], [0], [0], [1], [0, 0, 1, 1], [], []>} : vector<8x256xbf16>, vector<256x256xbf16>, vector<8x256xf32> -> vector<8x256xf32>
    %c9_59 = arith.constant 9 : index
    %c0_60 = arith.constant 0 : index
    %86 = vector.load %arg4[%c9_59, %c0_60] : memref<16x256xf32, #tpu.memory_space<vmem>>, vector<1x256xf32>
    %87 = vector.broadcast %86 : vector<1x256xf32> to vector<8x256xf32>
    %88 = arith.addf %85, %87 : vector<8x256xf32>
    %89 = vector.extract_strided_slice %88 {offsets = [0, 0], sizes = [8, 64], strides = [1, 1]} : vector<8x256xf32> to vector<8x64xf32>
    %c1_i32 = arith.constant 1 : i32
    %90 = vector.broadcast %c1_i32 : i32 to vector<8x1xi32>
    %91 = arith.cmpi eq, %37, %90 : vector<8x1xi32>
    %92 = vector.shape_cast %91 : vector<8x1xi1> to vector<8x1xi1>
    %93 = vector.broadcast %92 : vector<8x1xi1> to vector<8x64xi1>
    %94 = arith.select %93, %89, %63 : vector<8x64xi1>, vector<8x64xf32>
    %c0_61 = arith.constant 0 : index
    %c0_62 = arith.constant 0 : index
    %95 = vector.load %arg5[%c0_61, %c0_62] : memref<8x64xf32, #tpu.memory_space<vmem>>, vector<8x64xf32>
    tpu.vector_store %arg5[%c0_61, %c0_62], %94 {strides = array<i32>} : memref<8x64xf32, #tpu.memory_space<vmem>>, vector<8x64xf32>,
    return
  }
  func.func @transform_0(%arg0: i32) -> (i32, i32) {
    %c0_i32 = arith.constant 0 : i32
    %c0_i32_0 = arith.constant 0 : i32
    return %arg0, %c0_i32 : i32, i32
  }
  func.func @transform_1(%arg0: i32) -> (i32, i32) {
    %c0_i32 = arith.constant 0 : i32
    %c0_i32_0 = arith.constant 0 : i32
    return %arg0, %c0_i32 : i32, i32
  }
  func.func @transform_2(%arg0: i32) -> (i32, i32, i32) {
    %c0_i32 = arith.constant 0 : i32
    %c0_i32_0 = arith.constant 0 : i32
    %c0_i32_1 = arith.constant 0 : i32
    %c0_i32_2 = arith.constant 0 : i32
    return %c0_i32, %c0_i32_0, %c0_i32_1 : i32, i32, i32
  }
  func.func @transform_3(%arg0: i32) -> (i32, i32) {
    %c0_i32 = arith.constant 0 : i32
    %c0_i32_0 = arith.constant 0 : i32
    %c0_i32_1 = arith.constant 0 : i32
    return %c0_i32, %c0_i32_0 : i32, i32
  }
  func.func @transform_4(%arg0: i32) -> (i32, i32) {
    %c0_i32 = arith.constant 0 : i32
    %c0_i32_0 = arith.constant 0 : i32
    return %arg0, %c0_i32 : i32, i32
  }
}

</mosaic_0001>

<llo_original>
// kernel: mapping_network_forward.1
$region0: #{mapping_network_forward.1}
  #allocation0 [shape = 'u32[]', space=smem, size = 0x4, offset = 0x4, fixed_abs, tag = 'smem constant byte address 0x4 - core index']
  #allocation1 [shape = 'u32[72,128]{1,0:T(1,128)}', space=vmem, size = 0x9000, scoped, tag = 'internal scratch']
  %s0 = inlined_call_operand.vmem [shape: f32[8,256], index: 0, kind: input, shape index: {}]
  %s1 = inlined_call_operand.vmem [shape: s32[8,1], index: 1, kind: input, shape index: {}]
  %s2 = inlined_call_operand.hbm [shape: bf16[10,256,256], index: 2, kind: input, shape index: {}]
  %s3 = inlined_call_operand.hbm [shape: f32[16,256], index: 3, kind: input, shape index: {}]
  %s4 = inlined_call_operand.vmem [shape: f32[8,64], index: 4, kind: output, shape index: {}]
  %s5 = sld [smem:[#allocation0]]
  $region34: #{mapping_network_forward.1} parent=0
    _
  %s7 = ssub.s32 1, %s5
  %s8 = scalar_select 0, %s7, %s5
  $region1: #{mapping_network_forward.1} parent=0
    #allocation2 [shape = 'u8[1310720]{0}', space=vmem, size = 0x140000, scoped, tag = 'input window, operand 2, single buffered']
    #allocation3 [shape = 's32[1]{0}', space=sflag, size = 0x4, scoped, tag = 'scoped memory for mapping_network_forward.1']
    #allocation4 [shape = 'u8[16384]{0}', space=vmem, size = 0x4000, scoped, tag = 'input window, operand 3, single buffered']
    #allocation5 [shape = 's32[1]{0}', space=sflag, size = 0x4, scoped, tag = 'scoped memory for mapping_network_forward.1']
    %9 = vsyncpa [#allocation3], 0
    %10 = vsyncpa [#allocation5], 0
    // Predicated region
    $region2: #{mapping_network_forward.1} parent=1 // pred_check
      _
    $region3: #{mapping_network_forward.1} parent=1 // pred_check_branch
      %12 = sbr.rel (0) target = $region5
    $region4: #{mapping_network_forward.1} parent=1 // pred_region
      _
    $region5: #{mapping_network_forward.1} parent=1 // pred_fallthru
      _
    // Predicated region
    $region6: #{mapping_network_forward.1} parent=1 // pred_check
      _
    $region7: #{mapping_network_forward.1} parent=1 // pred_check_branch
      %14 = sbr.rel (0) target = $region9
    $region8: #{mapping_network_forward.1} parent=1 // pred_region
      _
    $region9: #{mapping_network_forward.1} parent=1 // pred_fallthru
      _
    // Predicated region
    $region10: #{mapping_network_forward.1} parent=1 // pred_check
      _
    $region11: #{mapping_network_forward.1} parent=1 // pred_check_branch
      %16 = sbr.rel (0) target = $region13
    $region12: #{mapping_network_forward.1} parent=1 // pred_region
      %18 = vsyncadd [#allocation3], 0
      %s19 = sshll.u32 %s2, 4
      %s20 = int_to_ptr.hbm [resolvable:$true] %s19
      %s21 = sshll.u32 [#allocation2], 4
      %s22 = int_to_ptr.vmem [resolvable:$true] %s21
      %27 = dma.hbm_to_vmem [thread:$0]  %s20, 40960, %s22, [#allocation3], 128, 128, 8
    $region13: #{mapping_network_forward.1} parent=1 // pred_fallthru
      _
    // Predicated region
    $region14: #{mapping_network_forward.1} parent=1 // pred_check
      _
    $region15: #{mapping_network_forward.1} parent=1 // pred_check_branch
      %29 = sbr.rel (0) target = $region17
    $region16: #{mapping_network_forward.1} parent=1 // pred_region
      %31 = vsyncadd [#allocation5], 0
      %s32 = sshll.u32 %s3, 4
      %s33 = int_to_ptr.hbm [resolvable:$true] %s32
      %s34 = sshll.u32 [#allocation4], 4
      %s35 = int_to_ptr.vmem [resolvable:$true] %s34
      %40 = dma.hbm_to_vmem [thread:$0]  %s33, 512, %s35, [#allocation5], 256, 256, 16
    $region17: #{mapping_network_forward.1} parent=1 // pred_fallthru
      _
    // Predicated region
    $region18: #{mapping_network_forward.1} parent=1 // pred_check
      _
    $region19: #{mapping_network_forward.1} parent=1 // pred_check_branch
      %42 = sbr.rel (0) target = $region21
    $region20: #{mapping_network_forward.1} parent=1 // pred_region
      %44 = dma.done [#allocation3], 40960
    $region21: #{mapping_network_forward.1} parent=1 // pred_fallthru
      _
    // Predicated region
    $region22: #{mapping_network_forward.1} parent=1 // pred_check
      _
    $region23: #{mapping_network_forward.1} parent=1 // pred_check_branch
      %46 = sbr.rel (0) target = $region25
    $region24: #{mapping_network_forward.1} parent=1 // pred_region
      %48 = dma.done [#allocation5], 512
    $region25: #{mapping_network_forward.1} parent=1 // pred_fallthru
      _
    %v49 = vld [vmem:[%s0] sm:$0xff]
    %v50 = vld [vmem:[%s0 + $0x8] sm:$0xff]
    %v51 = vpack.c.bf16 %v49, %v49
    %v52 = vpack.c.bf16 %v50, %v50
    %v53 = vld [vmem:[#allocation2] sm:$0xff]
    %v54 = vld [vmem:[#allocation2 + $0x8] sm:$0xff]
    %v55 = vld [vmem:[#allocation2 + $0x10] sm:$0xff]
    %v56 = vld [vmem:[#allocation2 + $0x18] sm:$0xff]
    %v57 = vld [vmem:[#allocation2 + $0x20] sm:$0xff]
    %v58 = vld [vmem:[#allocation2 + $0x28] sm:$0xff]
    %v59 = vld [vmem:[#allocation2 + $0x30] sm:$0xff]
    %v60 = vld [vmem:[#allocation2 + $0x38] sm:$0xff]
    %v61 = vld [vmem:[#allocation2 + $0x40] sm:$0xff]
    %v62 = vld [vmem:[#allocation2 + $0x48] sm:$0xff]
    %v63 = vld [vmem:[#allocation2 + $0x50] sm:$0xff]
    %v64 = vld [vmem:[#allocation2 + $0x58] sm:$0xff]
    %v65 = vld [vmem:[#allocation2 + $0x60] sm:$0xff]
    %v66 = vld [vmem:[#allocation2 + $0x68] sm:$0xff]
    %v67 = vld [vmem:[#allocation2 + $0x70] sm:$0xff]
    %v68 = vld [vmem:[#allocation2 + $0x78] sm:$0xff]
    %v69 = vld [vmem:[#allocation2 + $0x80] sm:$0xff]
    %v70 = vld [vmem:[#allocation2 + $0x88] sm:$0xff]
    %v71 = vld [vmem:[#allocation2 + $0x90] sm:$0xff]
    %v72 = vld [vmem:[#allocation2 + $0x98] sm:$0xff]
    %v73 = vld [vmem:[#allocation2 + $0xa0] sm:$0xff]
    %v74 = vld [vmem:[#allocation2 + $0xa8] sm:$0xff]
    %v75 = vld [vmem:[#allocation2 + $0xb0] sm:$0xff]
    %v76 = vld [vmem:[#allocation2 + $0xb8] sm:$0xff]
    %v77 = vld [vmem:[#allocation2 + $0xc0] sm:$0xff]
    %v78 = vld [vmem:[#allocation2 + $0xc8] sm:$0xff]
    %v79 = vld [vmem:[#allocation2 + $0xd0] sm:$0xff]
    %v80 = vld [vmem:[#allocation2 + $0xd8] sm:$0xff]
    %v81 = vld [vmem:[#allocation2 + $0xe0] sm:$0xff]
    %v82 = vld [vmem:[#allocation2 + $0xe8] sm:$0xff]
    %v83 = vld [vmem:[#allocation2 + $0xf0] sm:$0xff]
    %v84 = vld [vmem:[#allocation2 + $0xf8] sm:$0xff]
    %v85 = vld [vmem:[#allocation4] ss:$8 sm:$0x3]
    %v87 = vperm.slane %v85, 0
    %v88 = vperm.slane %v85, 1
    %v123 = vunpack.c.l.b16 %v53
    %v124 = vunpack.c.h.b16 %v53
    %v125 = vunpack.c.l.b16 %v54
    %v126 = vunpack.c.h.b16 %v54
    %v127 = vunpack.c.l.b16 %v55
    %v128 = vunpack.c.h.b16 %v55
    %v129 = vunpack.c.l.b16 %v56
    %v130 = vunpack.c.h.b16 %v56
    %v131 = vunpack.c.l.b16 %v57
    %v132 = vunpack.c.h.b16 %v57
    %v133 = vunpack.c.l.b16 %v58
    %v134 = vunpack.c.h.b16 %v58
    %v135 = vunpack.c.l.b16 %v59
    %v136 = vunpack.c.h.b16 %v59
    %v137 = vunpack.c.l.b16 %v60
    %v138 = vunpack.c.h.b16 %v60
    %v139 = vunpack.c.l.b16 %v61
    %v140 = vunpack.c.h.b16 %v61
    %v141 = vunpack.c.l.b16 %v62
    %v142 = vunpack.c.h.b16 %v62
    %v143 = vunpack.c.l.b16 %v63
    %v144 = vunpack.c.h.b16 %v63
    %v145 = vunpack.c.l.b16 %v64
    %v146 = vunpack.c.h.b16 %v64
    %v147 = vunpack.c.l.b16 %v65
    %v148 = vunpack.c.h.b16 %v65
    %v149 = vunpack.c.l.b16 %v66
    %v150 = vunpack.c.h.b16 %v66
    %v151 = vunpack.c.l.b16 %v67
    %v152 = vunpack.c.h.b16 %v67
    %v153 = vunpack.c.l.b16 %v68
    %v154 = vunpack.c.h.b16 %v68
    %v155 = vunpack.c.l.b16 %v69
    %v156 = vunpack.c.h.b16 %v69
    %v157 = vunpack.c.l.b16 %v70
    %v158 = vunpack.c.h.b16 %v70
    %v159 = vunpack.c.l.b16 %v71
    %v160 = vunpack.c.h.b16 %v71
    %v161 = vunpack.c.l.b16 %v72
    %v162 = vunpack.c.h.b16 %v72
    %v163 = vunpack.c.l.b16 %v73
    %v164 = vunpack.c.h.b16 %v73
    %v165 = vunpack.c.l.b16 %v74
    %v166 = vunpack.c.h.b16 %v74
    %v167 = vunpack.c.l.b16 %v75
    %v168 = vunpack.c.h.b16 %v75
    %v169 = vunpack.c.l.b16 %v76
    %v170 = vunpack.c.h.b16 %v76
    %v171 = vunpack.c.l.b16 %v77
    %v172 = vunpack.c.h.b16 %v77
    %v173 = vunpack.c.l.b16 %v78
    %v174 = vunpack.c.h.b16 %v78
    %v175 = vunpack.c.l.b16 %v79
    %v176 = vunpack.c.h.b16 %v79
    %v177 = vunpack.c.l.b16 %v80
    %v178 = vunpack.c.h.b16 %v80
    %v179 = vunpack.c.l.b16 %v81
    %v180 = vunpack.c.h.b16 %v81
    %v181 = vunpack.c.l.b16 %v82
    %v182 = vunpack.c.h.b16 %v82
    %v183 = vunpack.c.l.b16 %v83
    %v184 = vunpack.c.h.b16 %v83
    %v185 = vunpack.c.l.b16 %v84
    %v186 = vunpack.c.h.b16 %v84
    %v187 = vpack.c.b16 %v125, %v123
    %v188 = vpack.c.b16 %v126, %v124
    %v189 = vpack.c.b16 %v129, %v127
    %v190 = vpack.c.b16 %v130, %v128
    %v191 = vpack.c.b16 %v133, %v131
    %v192 = vpack.c.b16 %v134, %v132
    %v193 = vpack.c.b16 %v137, %v135
    %v194 = vpack.c.b16 %v138, %v136
    %v195 = vpack.c.b16 %v141, %v139
    %v196 = vpack.c.b16 %v142, %v140
    %v197 = vpack.c.b16 %v145, %v143
    %v198 = vpack.c.b16 %v146, %v144
    %v199 = vpack.c.b16 %v149, %v147
    %v200 = vpack.c.b16 %v150, %v148
    %v201 = vpack.c.b16 %v153, %v151
    %v202 = vpack.c.b16 %v154, %v152
    %v203 = vpack.c.b16 %v157, %v155
    %v204 = vpack.c.b16 %v158, %v156
    %v205 = vpack.c.b16 %v161, %v159
    %v206 = vpack.c.b16 %v162, %v160
    %v207 = vpack.c.b16 %v165, %v163
    %v208 = vpack.c.b16 %v166, %v164
    %v209 = vpack.c.b16 %v169, %v167
    %v210 = vpack.c.b16 %v170, %v168
    %v211 = vpack.c.b16 %v173, %v171
    %v212 = vpack.c.b16 %v174, %v172
    %v213 = vpack.c.b16 %v177, %v175
    %v214 = vpack.c.b16 %v178, %v176
    %v215 = vpack.c.b16 %v181, %v179
    %v216 = vpack.c.b16 %v182, %v180
    %v217 = vpack.c.b16 %v185, %v183
    %v218 = vpack.c.b16 %v186, %v184
    %251 = vmatpush.bf16.msra.mxu0 %v201
    %252 = vmatpush.bf16.msra.mxu0 %v199
    %253 = vmatpush.bf16.msra.mxu0 %v197
    %254 = vmatpush.bf16.msra.mxu0 %v195
    %255 = vmatpush.bf16.msra.mxu0 %v193
    %256 = vmatpush.bf16.msra.mxu0 %v191
    %257 = vmatpush.bf16.msra.mxu0 %v189
    %258 = vmatpush.bf16.msra.mxu0 %v187
    %259 = vmatmul.bf16.gmra.mxu0 %v51
    %v260 = vpop.f32.mrf.mxu0
    %v261 = vadd.f32 %v87, %v260
    %v262 = vpop.f32.mrf.mxu0
    %263 = vdwg.mxu0
    %264 = vmatpush.bf16.msra.mxu0 %v217
    %265 = vmatpush.bf16.msra.mxu0 %v215
    %266 = vmatpush.bf16.msra.mxu0 %v213
    %267 = vmatpush.bf16.msra.mxu0 %v211
    %268 = vmatpush.bf16.msra.mxu0 %v209
    %269 = vmatpush.bf16.msra.mxu0 %v207
    %270 = vmatpush.bf16.msra.mxu0 %v205
    %271 = vmatpush.bf16.msra.mxu0 %v203
    %272 = vmatmul.bf16.gmra.mxu0 %v52
    %v273 = vpop.f32.mrf.mxu0
    %v274 = vadd.f32 %v261, %v273
    %v275 = vpop.f32.mrf.mxu0
    %276 = vdwg.mxu0
    %277 = vmatpush.bf16.msra.mxu0 %v202
    %278 = vmatpush.bf16.msra.mxu0 %v200
    %279 = vmatpush.bf16.msra.mxu0 %v198
    %280 = vmatpush.bf16.msra.mxu0 %v196
    %281 = vmatpush.bf16.msra.mxu0 %v194
    %282 = vmatpush.bf16.msra.mxu0 %v192
    %283 = vmatpush.bf16.msra.mxu0 %v190
    %284 = vmatpush.bf16.msra.mxu0 %v188
    %285 = vmatmul.bf16.gmra.mxu0 %v51
    %v286 = vpop.f32.mrf.mxu0
    %v287 = vadd.f32 %v88, %v286
    %v288 = vpop.f32.mrf.mxu0
    %289 = vdwg.mxu0
    %290 = vmatpush.bf16.msra.mxu0 %v218
    %291 = vmatpush.bf16.msra.mxu0 %v216
    %292 = vmatpush.bf16.msra.mxu0 %v214
    %293 = vmatpush.bf16.msra.mxu0 %v212
    %294 = vmatpush.bf16.msra.mxu0 %v210
    %295 = vmatpush.bf16.msra.mxu0 %v208
    %296 = vmatpush.bf16.msra.mxu0 %v206
    %297 = vmatpush.bf16.msra.mxu0 %v204
    %298 = vmatmul.bf16.gmra.mxu0 %v52
    %v299 = vpop.f32.mrf.mxu0
    %v300 = vadd.f32 %v287, %v299
    %v301 = vpop.f32.mrf.mxu0
    %302 = vdwg.mxu0
    %v303 = vmax.f32 %v274, 0.0
    %v304 = vmax.f32 %v300, 0.0
    %v305 = vpack.c.bf16 %v303, %v303
    %v306 = vpack.c.bf16 %v304, %v304
    %s307 = scalar_lea.vmem [#allocation2], 256
    %v308 = vld [vmem:[%s307] sm:$0xff]
    %v309 = vld [vmem:[%s307 + $0x8] sm:$0xff]
    %v310 = vld [vmem:[%s307 + $0x10] sm:$0xff]
    %v311 = vld [vmem:[%s307 + $0x18] sm:$0xff]
    %v312 = vld [vmem:[%s307 + $0x20] sm:$0xff]
    %v313 = vld [vmem:[%s307 + $0x28] sm:$0xff]
    %v314 = vld [vmem:[%s307 + $0x30] sm:$0xff]
    %v315 = vld [vmem:[%s307 + $0x38] sm:$0xff]
    %v316 = vld [vmem:[%s307 + $0x40] sm:$0xff]
    %v317 = vld [vmem:[%s307 + $0x48] sm:$0xff]
    %v318 = vld [vmem:[%s307 + $0x50] sm:$0xff]
    %v319 = vld [vmem:[%s307 + $0x58] sm:$0xff]
    %v320 = vld [vmem:[%s307 + $0x60] sm:$0xff]
    %v321 = vld [vmem:[%s307 + $0x68] sm:$0xff]
    %v322 = vld [vmem:[%s307 + $0x70] sm:$0xff]
    %v323 = vld [vmem:[%s307 + $0x78] sm:$0xff]
    %v324 = vld [vmem:[%s307 + $0x80] sm:$0xff]
    %v325 = vld [vmem:[%s307 + $0x88] sm:$0xff]
    %v326 = vld [vmem:[%s307 + $0x90] sm:$0xff]
    %v327 = vld [vmem:[%s307 + $0x98] sm:$0xff]
    %v328 = vld [vmem:[%s307 + $0xa0] sm:$0xff]
    %v329 = vld [vmem:[%s307 + $0xa8] sm:$0xff]
    %v330 = vld [vmem:[%s307 + $0xb0] sm:$0xff]
    %v331 = vld [vmem:[%s307 + $0xb8] sm:$0xff]
    %v332 = vld [vmem:[%s307 + $0xc0] sm:$0xff]
    %v333 = vld [vmem:[%s307 + $0xc8] sm:$0xff]
    %v334 = vld [vmem:[%s307 + $0xd0] sm:$0xff]
    %v335 = vld [vmem:[%s307 + $0xd8] sm:$0xff]
    %v336 = vld [vmem:[%s307 + $0xe0] sm:$0xff]
    %v337 = vld [vmem:[%s307 + $0xe8] sm:$0xff]
    %v338 = vld [vmem:[%s307 + $0xf0] sm:$0xff]
    %v339 = vld [vmem:[%s307 + $0xf8] sm:$0xff]
    %s340 = scalar_lea.vmem [#allocation4], 1
    %v341 = vld [vmem:[%s340] ss:$8 sm:$0x3]
    %v343 = vperm.slane %v341, 0
    %v344 = vperm.slane %v341, 1
    %v379 = vunpack.c.l.b16 %v308
    %v380 = vunpack.c.h.b16 %v308
    %v381 = vunpack.c.l.b16 %v309
    %v382 = vunpack.c.h.b16 %v309
    %v383 = vunpack.c.l.b16 %v310
    %v384 = vunpack.c.h.b16 %v310
    %v385 = vunpack.c.l.b16 %v311
    %v386 = vunpack.c.h.b16 %v311
    %v387 = vunpack.c.l.b16 %v312
    %v388 = vunpack.c.h.b16 %v312
    %v389 = vunpack.c.l.b16 %v313
    %v390 = vunpack.c.h.b16 %v313
    %v391 = vunpack.c.l.b16 %v314
    %v392 = vunpack.c.h.b16 %v314
    %v393 = vunpack.c.l.b16 %v315
    %v394 = vunpack.c.h.b16 %v315
    %v395 = vunpack.c.l.b16 %v316
    %v396 = vunpack.c.h.b16 %v316
    %v397 = vunpack.c.l.b16 %v317
    %v398 = vunpack.c.h.b16 %v317
    %v399 = vunpack.c.l.b16 %v318
    %v400 = vunpack.c.h.b16 %v318
    %v401 = vunpack.c.l.b16 %v319
    %v402 = vunpack.c.h.b16 %v319
    %v403 = vunpack.c.l.b16 %v320
    %v404 = vunpack.c.h.b16 %v320
    %v405 = vunpack.c.l.b16 %v321
    %v406 = vunpack.c.h.b16 %v321
    %v407 = vunpack.c.l.b16 %v322
    %v408 = vunpack.c.h.b16 %v322
    %v409 = vunpack.c.l.b16 %v323
    %v410 = vunpack.c.h.b16 %v323
    %v411 = vunpack.c.l.b16 %v324
    %v412 = vunpack.c.h.b16 %v324
    %v413 = vunpack.c.l.b16 %v325
    %v414 = vunpack.c.h.b16 %v325
    %v415 = vunpack.c.l.b16 %v326
    %v416 = vunpack.c.h.b16 %v326
    %v417 = vunpack.c.l.b16 %v327
    %v418 = vunpack.c.h.b16 %v327
    %v419 = vunpack.c.l.b16 %v328
    %v420 = vunpack.c.h.b16 %v328
    %v421 = vunpack.c.l.b16 %v329
    %v422 = vunpack.c.h.b16 %v329
    %v423 = vunpack.c.l.b16 %v330
    %v424 = vunpack.c.h.b16 %v330
    %v425 = vunpack.c.l.b16 %v331
    %v426 = vunpack.c.h.b16 %v331
    %v427 = vunpack.c.l.b16 %v332
    %v428 = vunpack.c.h.b16 %v332
    %v429 = vunpack.c.l.b16 %v333
    %v430 = vunpack.c.h.b16 %v333
    %v431 = vunpack.c.l.b16 %v334
    %v432 = vunpack.c.h.b16 %v334
    %v433 = vunpack.c.l.b16 %v335
    %v434 = vunpack.c.h.b16 %v335
    %v435 = vunpack.c.l.b16 %v336
    %v436 = vunpack.c.h.b16 %v336
    %v437 = vunpack.c.l.b16 %v337
    %v438 = vunpack.c.h.b16 %v337
    %v439 = vunpack.c.l.b16 %v338
    %v440 = vunpack.c.h.b16 %v338
    %v441 = vunpack.c.l.b16 %v339
    %v442 = vunpack.c.h.b16 %v339
    %v443 = vpack.c.b16 %v381, %v379
    %v444 = vpack.c.b16 %v382, %v380
    %v445 = vpack.c.b16 %v385, %v383
    %v446 = vpack.c.b16 %v386, %v384
    %v447 = vpack.c.b16 %v389, %v387
    %v448 = vpack.c.b16 %v390, %v388
    %v449 = vpack.c.b16 %v393, %v391
    %v450 = vpack.c.b16 %v394, %v392
    %v451 = vpack.c.b16 %v397, %v395
    %v452 = vpack.c.b16 %v398, %v396
    %v453 = vpack.c.b16 %v401, %v399
    %v454 = vpack.c.b16 %v402, %v400
    %v455 = vpack.c.b16 %v405, %v403
    %v456 = vpack.c.b16 %v406, %v404
    %v457 = vpack.c.b16 %v409, %v407
    %v458 = vpack.c.b16 %v410, %v408
    %v459 = vpack.c.b16 %v413, %v411
    %v460 = vpack.c.b16 %v414, %v412
    %v461 = vpack.c.b16 %v417, %v415
    %v462 = vpack.c.b16 %v418, %v416
    %v463 = vpack.c.b16 %v421, %v419
    %v464 = vpack.c.b16 %v422, %v420
    %v465 = vpack.c.b16 %v425, %v423
    %v466 = vpack.c.b16 %v426, %v424
    %v467 = vpack.c.b16 %v429, %v427
    %v468 = vpack.c.b16 %v430, %v428
    %v469 = vpack.c.b16 %v433, %v431
    %v470 = vpack.c.b16 %v434, %v432
    %v471 = vpack.c.b16 %v437, %v435
    %v472 = vpack.c.b16 %v438, %v436
    %v473 = vpack.c.b16 %v441, %v439
    %v474 = vpack.c.b16 %v442, %v440
    %507 = vmatpush.bf16.msra.mxu0 %v457
    %508 = vmatpush.bf16.msra.mxu0 %v455
    %509 = vmatpush.bf16.msra.mxu0 %v453
    %510 = vmatpush.bf16.msra.mxu0 %v451
    %511 = vmatpush.bf16.msra.mxu0 %v449
    %512 = vmatpush.bf16.msra.mxu0 %v447
    %513 = vmatpush.bf16.msra.mxu0 %v445
    %514 = vmatpush.bf16.msra.mxu0 %v443
    %515 = vmatmul.bf16.gmra.mxu0 %v305
    %v516 = vpop.f32.mrf.mxu0
    %v517 = vadd.f32 %v343, %v516
    %v518 = vpop.f32.mrf.mxu0
    %519 = vdwg.mxu0
    %520 = vmatpush.bf16.msra.mxu0 %v473
    %521 = vmatpush.bf16.msra.mxu0 %v471
    %522 = vmatpush.bf16.msra.mxu0 %v469
    %523 = vmatpush.bf16.msra.mxu0 %v467
    %524 = vmatpush.bf16.msra.mxu0 %v465
    %525 = vmatpush.bf16.msra.mxu0 %v463
    %526 = vmatpush.bf16.msra.mxu0 %v461
    %527 = vmatpush.bf16.msra.mxu0 %v459
    %528 = vmatmul.bf16.gmra.mxu0 %v306
    %v529 = vpop.f32.mrf.mxu0
    %v530 = vadd.f32 %v517, %v529
    %v531 = vpop.f32.mrf.mxu0
    %532 = vdwg.mxu0
    %533 = vmatpush.bf16.msra.mxu0 %v458
    %534 = vmatpush.bf16.msra.mxu0 %v456
    %535 = vmatpush.bf16.msra.mxu0 %v454
    %536 = vmatpush.bf16.msra.mxu0 %v452
    %537 = vmatpush.bf16.msra.mxu0 %v450
    %538 = vmatpush.bf16.msra.mxu0 %v448
    %539 = vmatpush.bf16.msra.mxu0 %v446
    %540 = vmatpush.bf16.msra.mxu0 %v444
    %541 = vmatmul.bf16.gmra.mxu0 %v305
    %v542 = vpop.f32.mrf.mxu0
    %v543 = vadd.f32 %v344, %v542
    %v544 = vpop.f32.mrf.mxu0
    %545 = vdwg.mxu0
    %546 = vmatpush.bf16.msra.mxu0 %v474
    %547 = vmatpush.bf16.msra.mxu0 %v472
    %548 = vmatpush.bf16.msra.mxu0 %v470
    %549 = vmatpush.bf16.msra.mxu0 %v468
    %550 = vmatpush.bf16.msra.mxu0 %v466
    %551 = vmatpush.bf16.msra.mxu0 %v464
    %552 = vmatpush.bf16.msra.mxu0 %v462
    %553 = vmatpush.bf16.msra.mxu0 %v460
    %554 = vmatmul.bf16.gmra.mxu0 %v306
    %v555 = vpop.f32.mrf.mxu0
    %v556 = vadd.f32 %v543, %v555
    %v557 = vpop.f32.mrf.mxu0
    %558 = vdwg.mxu0
    %v559 = vmax.f32 %v530, 0.0
    %v560 = vmax.f32 %v556, 0.0
    %v561 = vpack.c.bf16 %v559, %v559
    %v562 = vpack.c.bf16 %v560, %v560
    %s563 = scalar_lea.vmem [#allocation2], 512
    %v564 = vld [vmem:[%s563] sm:$0xff]
    %v565 = vld [vmem:[%s563 + $0x8] sm:$0xff]
    %v566 = vld [vmem:[%s563 + $0x10] sm:$0xff]
    %v567 = vld [vmem:[%s563 + $0x18] sm:$0xff]
    %v568 = vld [vmem:[%s563 + $0x20] sm:$0xff]
    %v569 = vld [vmem:[%s563 + $0x28] sm:$0xff]
    %v570 = vld [vmem:[%s563 + $0x30] sm:$0xff]
    %v571 = vld [vmem:[%s563 + $0x38] sm:$0xff]
    %v572 = vld [vmem:[%s563 + $0x40] sm:$0xff]
    %v573 = vld [vmem:[%s563 + $0x48] sm:$0xff]
    %v574 = vld [vmem:[%s563 + $0x50] sm:$0xff]
    %v575 = vld [vmem:[%s563 + $0x58] sm:$0xff]
    %v576 = vld [vmem:[%s563 + $0x60] sm:$0xff]
    %v577 = vld [vmem:[%s563 + $0x68] sm:$0xff]
    %v578 = vld [vmem:[%s563 + $0x70] sm:$0xff]
    %v579 = vld [vmem:[%s563 + $0x78] sm:$0xff]
    %v580 = vld [vmem:[%s563 + $0x80] sm:$0xff]
    %v581 = vld [vmem:[%s563 + $0x88] sm:$0xff]
    %v582 = vld [vmem:[%s563 + $0x90] sm:$0xff]
    %v583 = vld [vmem:[%s563 + $0x98] sm:$0xff]
    %v584 = vld [vmem:[%s563 + $0xa0] sm:$0xff]
    %v585 = vld [vmem:[%s563 + $0xa8] sm:$0xff]
    %v586 = vld [vmem:[%s563 + $0xb0] sm:$0xff]
    %v587 = vld [vmem:[%s563 + $0xb8] sm:$0xff]
    %v588 = vld [vmem:[%s563 + $0xc0] sm:$0xff]
    %v589 = vld [vmem:[%s563 + $0xc8] sm:$0xff]
    %v590 = vld [vmem:[%s563 + $0xd0] sm:$0xff]
    %v591 = vld [vmem:[%s563 + $0xd8] sm:$0xff]
    %v592 = vld [vmem:[%s563 + $0xe0] sm:$0xff]
    %v593 = vld [vmem:[%s563 + $0xe8] sm:$0xff]
    %v594 = vld [vmem:[%s563 + $0xf0] sm:$0xff]
    %v595 = vld [vmem:[%s563 + $0xf8] sm:$0xff]
    %s596 = scalar_lea.vmem [#allocation4], 2
    %v597 = vld [vmem:[%s596] ss:$8 sm:$0x3]
    %v599 = vperm.slane %v597, 0
    %v600 = vperm.slane %v597, 1
    %v635 = vunpack.c.l.b16 %v564
    %v636 = vunpack.c.h.b16 %v564
    %v637 = vunpack.c.l.b16 %v565
    %v638 = vunpack.c.h.b16 %v565
    %v639 = vunpack.c.l.b16 %v566
    %v640 = vunpack.c.h.b16 %v566
    %v641 = vunpack.c.l.b16 %v567
    %v642 = vunpack.c.h.b16 %v567
    %v643 = vunpack.c.l.b16 %v568
    %v644 = vunpack.c.h.b16 %v568
    %v645 = vunpack.c.l.b16 %v569
    %v646 = vunpack.c.h.b16 %v569
    %v647 = vunpack.c.l.b16 %v570
    %v648 = vunpack.c.h.b16 %v570
    %v649 = vunpack.c.l.b16 %v571
    %v650 = vunpack.c.h.b16 %v571
    %v651 = vunpack.c.l.b16 %v572
    %v652 = vunpack.c.h.b16 %v572
    %v653 = vunpack.c.l.b16 %v573
    %v654 = vunpack.c.h.b16 %v573
    %v655 = vunpack.c.l.b16 %v574
    %v656 = vunpack.c.h.b16 %v574
    %v657 = vunpack.c.l.b16 %v575
    %v658 = vunpack.c.h.b16 %v575
    %v659 = vunpack.c.l.b16 %v576
    %v660 = vunpack.c.h.b16 %v576
    %v661 = vunpack.c.l.b16 %v577
    %v662 = vunpack.c.h.b16 %v577
    %v663 = vunpack.c.l.b16 %v578
    %v664 = vunpack.c.h.b16 %v578
    %v665 = vunpack.c.l.b16 %v579
    %v666 = vunpack.c.h.b16 %v579
    %v667 = vunpack.c.l.b16 %v580
    %v668 = vunpack.c.h.b16 %v580
    %v669 = vunpack.c.l.b16 %v581
    %v670 = vunpack.c.h.b16 %v581
    %v671 = vunpack.c.l.b16 %v582
    %v672 = vunpack.c.h.b16 %v582
    %v673 = vunpack.c.l.b16 %v583
    %v674 = vunpack.c.h.b16 %v583
    %v675 = vunpack.c.l.b16 %v584
    %v676 = vunpack.c.h.b16 %v584
    %v677 = vunpack.c.l.b16 %v585
    %v678 = vunpack.c.h.b16 %v585
    %v679 = vunpack.c.l.b16 %v586
    %v680 = vunpack.c.h.b16 %v586
    %v681 = vunpack.c.l.b16 %v587
    %v682 = vunpack.c.h.b16 %v587
    %v683 = vunpack.c.l.b16 %v588
    %v684 = vunpack.c.h.b16 %v588
    %v685 = vunpack.c.l.b16 %v589
    %v686 = vunpack.c.h.b16 %v589
    %v687 = vunpack.c.l.b16 %v590
    %v688 = vunpack.c.h.b16 %v590
    %v689 = vunpack.c.l.b16 %v591
    %v690 = vunpack.c.h.b16 %v591
    %v691 = vunpack.c.l.b16 %v592
    %v692 = vunpack.c.h.b16 %v592
    %v693 = vunpack.c.l.b16 %v593
    %v694 = vunpack.c.h.b16 %v593
    %v695 = vunpack.c.l.b16 %v594
    %v696 = vunpack.c.h.b16 %v594
    %v697 = vunpack.c.l.b16 %v595
    %v698 = vunpack.c.h.b16 %v595
    %v699 = vpack.c.b16 %v637, %v635
    %v700 = vpack.c.b16 %v638, %v636
    %v701 = vpack.c.b16 %v641, %v639
    %v702 = vpack.c.b16 %v642, %v640
    %v703 = vpack.c.b16 %v645, %v643
    %v704 = vpack.c.b16 %v646, %v644
    %v705 = vpack.c.b16 %v649, %v647
    %v706 = vpack.c.b16 %v650, %v648
    %v707 = vpack.c.b16 %v653, %v651
    %v708 = vpack.c.b16 %v654, %v652
    %v709 = vpack.c.b16 %v657, %v655
    %v710 = vpack.c.b16 %v658, %v656
    %v711 = vpack.c.b16 %v661, %v659
    %v712 = vpack.c.b16 %v662, %v660
    %v713 = vpack.c.b16 %v665, %v663
    %v714 = vpack.c.b16 %v666, %v664
    %v715 = vpack.c.b16 %v669, %v667
    %v716 = vpack.c.b16 %v670, %v668
    %v717 = vpack.c.b16 %v673, %v671
    %v718 = vpack.c.b16 %v674, %v672
    %v719 = vpack.c.b16 %v677, %v675
    %v720 = vpack.c.b16 %v678, %v676
    %v721 = vpack.c.b16 %v681, %v679
    %v722 = vpack.c.b16 %v682, %v680
    %v723 = vpack.c.b16 %v685, %v683
    %v724 = vpack.c.b16 %v686, %v684
    %v725 = vpack.c.b16 %v689, %v687
    %v726 = vpack.c.b16 %v690, %v688
    %v727 = vpack.c.b16 %v693, %v691
    %v728 = vpack.c.b16 %v694, %v692
    %v729 = vpack.c.b16 %v697, %v695
    %v730 = vpack.c.b16 %v698, %v696
    %763 = vmatpush.bf16.msra.mxu0 %v713
    %764 = vmatpush.bf16.msra.mxu0 %v711
    %765 = vmatpush.bf16.msra.mxu0 %v709
    %766 = vmatpush.bf16.msra.mxu0 %v707
    %767 = vmatpush.bf16.msra.mxu0 %v705
    %768 = vmatpush.bf16.msra.mxu0 %v703
    %769 = vmatpush.bf16.msra.mxu0 %v701
    %770 = vmatpush.bf16.msra.mxu0 %v699
    %771 = vmatmul.bf16.gmra.mxu0 %v561
    %v772 = vpop.f32.mrf.mxu0
    %v773 = vadd.f32 %v599, %v772
    %v774 = vpop.f32.mrf.mxu0
    %775 = vdwg.mxu0
    %776 = vmatpush.bf16.msra.mxu0 %v729
    %777 = vmatpush.bf16.msra.mxu0 %v727
    %778 = vmatpush.bf16.msra.mxu0 %v725
    %779 = vmatpush.bf16.msra.mxu0 %v723
    %780 = vmatpush.bf16.msra.mxu0 %v721
    %781 = vmatpush.bf16.msra.mxu0 %v719
    %782 = vmatpush.bf16.msra.mxu0 %v717
    %783 = vmatpush.bf16.msra.mxu0 %v715
    %784 = vmatmul.bf16.gmra.mxu0 %v562
    %v785 = vpop.f32.mrf.mxu0
    %v786 = vadd.f32 %v773, %v785
    %v787 = vpop.f32.mrf.mxu0
    %788 = vdwg.mxu0
    %789 = vmatpush.bf16.msra.mxu0 %v714
    %790 = vmatpush.bf16.msra.mxu0 %v712
    %791 = vmatpush.bf16.msra.mxu0 %v710
    %792 = vmatpush.bf16.msra.mxu0 %v708
    %793 = vmatpush.bf16.msra.mxu0 %v706
    %794 = vmatpush.bf16.msra.mxu0 %v704
    %795 = vmatpush.bf16.msra.mxu0 %v702
    %796 = vmatpush.bf16.msra.mxu0 %v700
    %797 = vmatmul.bf16.gmra.mxu0 %v561
    %v798 = vpop.f32.mrf.mxu0
    %v799 = vadd.f32 %v600, %v798
    %v800 = vpop.f32.mrf.mxu0
    %801 = vdwg.mxu0
    %802 = vmatpush.bf16.msra.mxu0 %v730
    %803 = vmatpush.bf16.msra.mxu0 %v728
    %804 = vmatpush.bf16.msra.mxu0 %v726
    %805 = vmatpush.bf16.msra.mxu0 %v724
    %806 = vmatpush.bf16.msra.mxu0 %v722
    %807 = vmatpush.bf16.msra.mxu0 %v720
    %808 = vmatpush.bf16.msra.mxu0 %v718
    %809 = vmatpush.bf16.msra.mxu0 %v716
    %810 = vmatmul.bf16.gmra.mxu0 %v562
    %v811 = vpop.f32.mrf.mxu0
    %v812 = vadd.f32 %v799, %v811
    %v813 = vpop.f32.mrf.mxu0
    %814 = vdwg.mxu0
    %v815 = vmax.f32 %v786, 0.0
    %v816 = vmax.f32 %v812, 0.0
    %v817 = vpack.c.bf16 %v815, %v815
    %v818 = vpack.c.bf16 %v816, %v816
    %s819 = scalar_lea.vmem [#allocation2], 768
    %v820 = vld [vmem:[%s819] sm:$0xff]
    %v821 = vld [vmem:[%s819 + $0x8] sm:$0xff]
    %v822 = vld [vmem:[%s819 + $0x10] sm:$0xff]
    %v823 = vld [vmem:[%s819 + $0x18] sm:$0xff]
    %v824 = vld [vmem:[%s819 + $0x20] sm:$0xff]
    %v825 = vld [vmem:[%s819 + $0x28] sm:$0xff]
    %v826 = vld [vmem:[%s819 + $0x30] sm:$0xff]
    %v827 = vld [vmem:[%s819 + $0x38] sm:$0xff]
    %v828 = vld [vmem:[%s819 + $0x40] sm:$0xff]
    %v829 = vld [vmem:[%s819 + $0x48] sm:$0xff]
    %v830 = vld [vmem:[%s819 + $0x50] sm:$0xff]
    %v831 = vld [vmem:[%s819 + $0x58] sm:$0xff]
    %v832 = vld [vmem:[%s819 + $0x60] sm:$0xff]
    %v833 = vld [vmem:[%s819 + $0x68] sm:$0xff]
    %v834 = vld [vmem:[%s819 + $0x70] sm:$0xff]
    %v835 = vld [vmem:[%s819 + $0x78] sm:$0xff]
    %v836 = vld [vmem:[%s819 + $0x80] sm:$0xff]
    %v837 = vld [vmem:[%s819 + $0x88] sm:$0xff]
    %v838 = vld [vmem:[%s819 + $0x90] sm:$0xff]
    %v839 = vld [vmem:[%s819 + $0x98] sm:$0xff]
    %v840 = vld [vmem:[%s819 + $0xa0] sm:$0xff]
    %v841 = vld [vmem:[%s819 + $0xa8] sm:$0xff]
    %v842 = vld [vmem:[%s819 + $0xb0] sm:$0xff]
    %v843 = vld [vmem:[%s819 + $0xb8] sm:$0xff]
    %v844 = vld [vmem:[%s819 + $0xc0] sm:$0xff]
    %v845 = vld [vmem:[%s819 + $0xc8] sm:$0xff]
    %v846 = vld [vmem:[%s819 + $0xd0] sm:$0xff]
    %v847 = vld [vmem:[%s819 + $0xd8] sm:$0xff]
    %v848 = vld [vmem:[%s819 + $0xe0] sm:$0xff]
    %v849 = vld [vmem:[%s819 + $0xe8] sm:$0xff]
    %v850 = vld [vmem:[%s819 + $0xf0] sm:$0xff]
    %v851 = vld [vmem:[%s819 + $0xf8] sm:$0xff]
    %s852 = scalar_lea.vmem [#allocation4], 3
    %v853 = vld [vmem:[%s852] ss:$8 sm:$0x3]
    %v855 = vperm.slane %v853, 0
    %v856 = vperm.slane %v853, 1
    %v891 = vunpack.c.l.b16 %v820
    %v892 = vunpack.c.h.b16 %v820
    %v893 = vunpack.c.l.b16 %v821
    %v894 = vunpack.c.h.b16 %v821
    %v895 = vunpack.c.l.b16 %v822
    %v896 = vunpack.c.h.b16 %v822
    %v897 = vunpack.c.l.b16 %v823
    %v898 = vunpack.c.h.b16 %v823
    %v899 = vunpack.c.l.b16 %v824
    %v900 = vunpack.c.h.b16 %v824
    %v901 = vunpack.c.l.b16 %v825
    %v902 = vunpack.c.h.b16 %v825
    %v903 = vunpack.c.l.b16 %v826
    %v904 = vunpack.c.h.b16 %v826
    %v905 = vunpack.c.l.b16 %v827
    %v906 = vunpack.c.h.b16 %v827
    %v907 = vunpack.c.l.b16 %v828
    %v908 = vunpack.c.h.b16 %v828
    %v909 = vunpack.c.l.b16 %v829
    %v910 = vunpack.c.h.b16 %v829
    %v911 = vunpack.c.l.b16 %v830
    %v912 = vunpack.c.h.b16 %v830
    %v913 = vunpack.c.l.b16 %v831
    %v914 = vunpack.c.h.b16 %v831
    %v915 = vunpack.c.l.b16 %v832
    %v916 = vunpack.c.h.b16 %v832
    %v917 = vunpack.c.l.b16 %v833
    %v918 = vunpack.c.h.b16 %v833
    %v919 = vunpack.c.l.b16 %v834
    %v920 = vunpack.c.h.b16 %v834
    %v921 = vunpack.c.l.b16 %v835
    %v922 = vunpack.c.h.b16 %v835
    %v923 = vunpack.c.l.b16 %v836
    %v924 = vunpack.c.h.b16 %v836
    %v925 = vunpack.c.l.b16 %v837
    %v926 = vunpack.c.h.b16 %v837
    %v927 = vunpack.c.l.b16 %v838
    %v928 = vunpack.c.h.b16 %v838
    %v929 = vunpack.c.l.b16 %v839
    %v930 = vunpack.c.h.b16 %v839
    %v931 = vunpack.c.l.b16 %v840
    %v932 = vunpack.c.h.b16 %v840
    %v933 = vunpack.c.l.b16 %v841
    %v934 = vunpack.c.h.b16 %v841
    %v935 = vunpack.c.l.b16 %v842
    %v936 = vunpack.c.h.b16 %v842
    %v937 = vunpack.c.l.b16 %v843
    %v938 = vunpack.c.h.b16 %v843
    %v939 = vunpack.c.l.b16 %v844
    %v940 = vunpack.c.h.b16 %v844
    %v941 = vunpack.c.l.b16 %v845
    %v942 = vunpack.c.h.b16 %v845
    %v943 = vunpack.c.l.b16 %v846
    %v944 = vunpack.c.h.b16 %v846
    %v945 = vunpack.c.l.b16 %v847
    %v946 = vunpack.c.h.b16 %v847
    %v947 = vunpack.c.l.b16 %v848
    %v948 = vunpack.c.h.b16 %v848
    %v949 = vunpack.c.l.b16 %v849
    %v950 = vunpack.c.h.b16 %v849
    %v951 = vunpack.c.l.b16 %v850
    %v952 = vunpack.c.h.b16 %v850
    %v953 = vunpack.c.l.b16 %v851
    %v954 = vunpack.c.h.b16 %v851
    %v955 = vpack.c.b16 %v893, %v891
    %v956 = vpack.c.b16 %v894, %v892
    %v957 = vpack.c.b16 %v897, %v895
    %v958 = vpack.c.b16 %v898, %v896
    %v959 = vpack.c.b16 %v901, %v899
    %v960 = vpack.c.b16 %v902, %v900
    %v961 = vpack.c.b16 %v905, %v903
    %v962 = vpack.c.b16 %v906, %v904
    %v963 = vpack.c.b16 %v909, %v907
    %v964 = vpack.c.b16 %v910, %v908
    %v965 = vpack.c.b16 %v913, %v911
    %v966 = vpack.c.b16 %v914, %v912
    %v967 = vpack.c.b16 %v917, %v915
    %v968 = vpack.c.b16 %v918, %v916
    %v969 = vpack.c.b16 %v921, %v919
    %v970 = vpack.c.b16 %v922, %v920
    %v971 = vpack.c.b16 %v925, %v923
    %v972 = vpack.c.b16 %v926, %v924
    %v973 = vpack.c.b16 %v929, %v927
    %v974 = vpack.c.b16 %v930, %v928
    %v975 = vpack.c.b16 %v933, %v931
    %v976 = vpack.c.b16 %v934, %v932
    %v977 = vpack.c.b16 %v937, %v935
    %v978 = vpack.c.b16 %v938, %v936
    %v979 = vpack.c.b16 %v941, %v939
    %v980 = vpack.c.b16 %v942, %v940
    %v981 = vpack.c.b16 %v945, %v943
    %v982 = vpack.c.b16 %v946, %v944
    %v983 = vpack.c.b16 %v949, %v947
    %v984 = vpack.c.b16 %v950, %v948
    %v985 = vpack.c.b16 %v953, %v951
    %v986 = vpack.c.b16 %v954, %v952
    %1019 = vmatpush.bf16.msra.mxu0 %v969
    %1020 = vmatpush.bf16.msra.mxu0 %v967
    %1021 = vmatpush.bf16.msra.mxu0 %v965
    %1022 = vmatpush.bf16.msra.mxu0 %v963
    %1023 = vmatpush.bf16.msra.mxu0 %v961
    %1024 = vmatpush.bf16.msra.mxu0 %v959
    %1025 = vmatpush.bf16.msra.mxu0 %v957
    %1026 = vmatpush.bf16.msra.mxu0 %v955
    %1027 = vmatmul.bf16.gmra.mxu0 %v817
    %v1028 = vpop.f32.mrf.mxu0
    %v1029 = vadd.f32 %v855, %v1028
    %v1030 = vpop.f32.mrf.mxu0
    %1031 = vdwg.mxu0
    %1032 = vmatpush.bf16.msra.mxu0 %v985
    %1033 = vmatpush.bf16.msra.mxu0 %v983
    %1034 = vmatpush.bf16.msra.mxu0 %v981
    %1035 = vmatpush.bf16.msra.mxu0 %v979
    %1036 = vmatpush.bf16.msra.mxu0 %v977
    %1037 = vmatpush.bf16.msra.mxu0 %v975
    %1038 = vmatpush.bf16.msra.mxu0 %v973
    %1039 = vmatpush.bf16.msra.mxu0 %v971
    %1040 = vmatmul.bf16.gmra.mxu0 %v818
    %v1041 = vpop.f32.mrf.mxu0
    %v1042 = vadd.f32 %v1029, %v1041
    %v1043 = vpop.f32.mrf.mxu0
    %1044 = vdwg.mxu0
    %1045 = vmatpush.bf16.msra.mxu0 %v970
    %1046 = vmatpush.bf16.msra.mxu0 %v968
    %1047 = vmatpush.bf16.msra.mxu0 %v966
    %1048 = vmatpush.bf16.msra.mxu0 %v964
    %1049 = vmatpush.bf16.msra.mxu0 %v962
    %1050 = vmatpush.bf16.msra.mxu0 %v960
    %1051 = vmatpush.bf16.msra.mxu0 %v958
    %1052 = vmatpush.bf16.msra.mxu0 %v956
    %1053 = vmatmul.bf16.gmra.mxu0 %v817
    %v1054 = vpop.f32.mrf.mxu0
    %v1055 = vadd.f32 %v856, %v1054
    %v1056 = vpop.f32.mrf.mxu0
    %1057 = vdwg.mxu0
    %1058 = vmatpush.bf16.msra.mxu0 %v986
    %1059 = vmatpush.bf16.msra.mxu0 %v984
    %1060 = vmatpush.bf16.msra.mxu0 %v982
    %1061 = vmatpush.bf16.msra.mxu0 %v980
    %1062 = vmatpush.bf16.msra.mxu0 %v978
    %1063 = vmatpush.bf16.msra.mxu0 %v976
    %1064 = vmatpush.bf16.msra.mxu0 %v974
    %1065 = vmatpush.bf16.msra.mxu0 %v972
    %1066 = vmatmul.bf16.gmra.mxu0 %v818
    %v1067 = vpop.f32.mrf.mxu0
    %v1068 = vadd.f32 %v1055, %v1067
    %v1069 = vpop.f32.mrf.mxu0
    %1070 = vdwg.mxu0
    %v1071 = vmax.f32 %v1042, 0.0
    %v1072 = vmax.f32 %v1068, 0.0
    %v1073 = vld [vmem:[%s1] sm:$0xff]
    %v1074 = vpack.c.bf16 %v1071, %v1071
    %v1075 = vpack.c.bf16 %v1072, %v1072
    %s1076 = scalar_lea.vmem [#allocation2], 1024
    %v1077 = vld [vmem:[%s1076] sm:$0xff]
    %v1078 = vld [vmem:[%s1076 + $0x8] sm:$0xff]
    %v1079 = vld [vmem:[%s1076 + $0x10] sm:$0xff]
    %v1080 = vld [vmem:[%s1076 + $0x18] sm:$0xff]
    %v1081 = vld [vmem:[%s1076 + $0x20] sm:$0xff]
    %v1082 = vld [vmem:[%s1076 + $0x28] sm:$0xff]
    %v1083 = vld [vmem:[%s1076 + $0x30] sm:$0xff]
    %v1084 = vld [vmem:[%s1076 + $0x38] sm:$0xff]
    %v1085 = vld [vmem:[%s1076 + $0x40] sm:$0xff]
    %v1086 = vld [vmem:[%s1076 + $0x48] sm:$0xff]
    %v1087 = vld [vmem:[%s1076 + $0x50] sm:$0xff]
    %v1088 = vld [vmem:[%s1076 + $0x58] sm:$0xff]
    %v1089 = vld [vmem:[%s1076 + $0x60] sm:$0xff]
    %v1090 = vld [vmem:[%s1076 + $0x68] sm:$0xff]
    %v1091 = vld [vmem:[%s1076 + $0x70] sm:$0xff]
    %v1092 = vld [vmem:[%s1076 + $0x78] sm:$0xff]
    %v1093 = vld [vmem:[%s1076 + $0x80] sm:$0xff]
    %v1094 = vld [vmem:[%s1076 + $0x88] sm:$0xff]
    %v1095 = vld [vmem:[%s1076 + $0x90] sm:$0xff]
    %v1096 = vld [vmem:[%s1076 + $0x98] sm:$0xff]
    %v1097 = vld [vmem:[%s1076 + $0xa0] sm:$0xff]
    %v1098 = vld [vmem:[%s1076 + $0xa8] sm:$0xff]
    %v1099 = vld [vmem:[%s1076 + $0xb0] sm:$0xff]
    %v1100 = vld [vmem:[%s1076 + $0xb8] sm:$0xff]
    %v1101 = vld [vmem:[%s1076 + $0xc0] sm:$0xff]
    %v1102 = vld [vmem:[%s1076 + $0xc8] sm:$0xff]
    %v1103 = vld [vmem:[%s1076 + $0xd0] sm:$0xff]
    %v1104 = vld [vmem:[%s1076 + $0xd8] sm:$0xff]
    %v1105 = vld [vmem:[%s1076 + $0xe0] sm:$0xff]
    %v1106 = vld [vmem:[%s1076 + $0xe8] sm:$0xff]
    %v1107 = vld [vmem:[%s1076 + $0xf0] sm:$0xff]
    %v1108 = vld [vmem:[%s1076 + $0xf8] sm:$0xff]
    %s1109 = scalar_lea.vmem [#allocation4], 4
    %v1110 = vld [vmem:[%s1109] ss:$8 sm:$0x3]
    %v1112 = vperm.slane %v1110, 0
    %v1113 = vperm.slane %v1110, 1
    %v1148 = vunpack.c.l.b16 %v1077
    %v1149 = vunpack.c.h.b16 %v1077
    %v1150 = vunpack.c.l.b16 %v1078
    %v1151 = vunpack.c.h.b16 %v1078
    %v1152 = vunpack.c.l.b16 %v1079
    %v1153 = vunpack.c.h.b16 %v1079
    %v1154 = vunpack.c.l.b16 %v1080
    %v1155 = vunpack.c.h.b16 %v1080
    %v1156 = vunpack.c.l.b16 %v1081
    %v1157 = vunpack.c.h.b16 %v1081
    %v1158 = vunpack.c.l.b16 %v1082
    %v1159 = vunpack.c.h.b16 %v1082
    %v1160 = vunpack.c.l.b16 %v1083
    %v1161 = vunpack.c.h.b16 %v1083
    %v1162 = vunpack.c.l.b16 %v1084
    %v1163 = vunpack.c.h.b16 %v1084
    %v1164 = vunpack.c.l.b16 %v1085
    %v1165 = vunpack.c.h.b16 %v1085
    %v1166 = vunpack.c.l.b16 %v1086
    %v1167 = vunpack.c.h.b16 %v1086
    %v1168 = vunpack.c.l.b16 %v1087
    %v1169 = vunpack.c.h.b16 %v1087
    %v1170 = vunpack.c.l.b16 %v1088
    %v1171 = vunpack.c.h.b16 %v1088
    %v1172 = vunpack.c.l.b16 %v1089
    %v1173 = vunpack.c.h.b16 %v1089
    %v1174 = vunpack.c.l.b16 %v1090
    %v1175 = vunpack.c.h.b16 %v1090
    %v1176 = vunpack.c.l.b16 %v1091
    %v1177 = vunpack.c.h.b16 %v1091
    %v1178 = vunpack.c.l.b16 %v1092
    %v1179 = vunpack.c.h.b16 %v1092
    %v1180 = vunpack.c.l.b16 %v1093
    %v1181 = vunpack.c.h.b16 %v1093
    %v1182 = vunpack.c.l.b16 %v1094
    %v1183 = vunpack.c.h.b16 %v1094
    %v1184 = vunpack.c.l.b16 %v1095
    %v1185 = vunpack.c.h.b16 %v1095
    %v1186 = vunpack.c.l.b16 %v1096
    %v1187 = vunpack.c.h.b16 %v1096
    %v1188 = vunpack.c.l.b16 %v1097
    %v1189 = vunpack.c.h.b16 %v1097
    %v1190 = vunpack.c.l.b16 %v1098
    %v1191 = vunpack.c.h.b16 %v1098
    %v1192 = vunpack.c.l.b16 %v1099
    %v1193 = vunpack.c.h.b16 %v1099
    %v1194 = vunpack.c.l.b16 %v1100
    %v1195 = vunpack.c.h.b16 %v1100
    %v1196 = vunpack.c.l.b16 %v1101
    %v1197 = vunpack.c.h.b16 %v1101
    %v1198 = vunpack.c.l.b16 %v1102
    %v1199 = vunpack.c.h.b16 %v1102
    %v1200 = vunpack.c.l.b16 %v1103
    %v1201 = vunpack.c.h.b16 %v1103
    %v1202 = vunpack.c.l.b16 %v1104
    %v1203 = vunpack.c.h.b16 %v1104
    %v1204 = vunpack.c.l.b16 %v1105
    %v1205 = vunpack.c.h.b16 %v1105
    %v1206 = vunpack.c.l.b16 %v1106
    %v1207 = vunpack.c.h.b16 %v1106
    %v1208 = vunpack.c.l.b16 %v1107
    %v1209 = vunpack.c.h.b16 %v1107
    %v1210 = vunpack.c.l.b16 %v1108
    %v1211 = vunpack.c.h.b16 %v1108
    %v1212 = vpack.c.b16 %v1150, %v1148
    %v1213 = vpack.c.b16 %v1151, %v1149
    %v1214 = vpack.c.b16 %v1154, %v1152
    %v1215 = vpack.c.b16 %v1155, %v1153
    %v1216 = vpack.c.b16 %v1158, %v1156
    %v1217 = vpack.c.b16 %v1159, %v1157
    %v1218 = vpack.c.b16 %v1162, %v1160
    %v1219 = vpack.c.b16 %v1163, %v1161
    %v1220 = vpack.c.b16 %v1166, %v1164
    %v1221 = vpack.c.b16 %v1167, %v1165
    %v1222 = vpack.c.b16 %v1170, %v1168
    %v1223 = vpack.c.b16 %v1171, %v1169
    %v1224 = vpack.c.b16 %v1174, %v1172
    %v1225 = vpack.c.b16 %v1175, %v1173
    %v1226 = vpack.c.b16 %v1178, %v1176
    %v1227 = vpack.c.b16 %v1179, %v1177
    %v1228 = vpack.c.b16 %v1182, %v1180
    %v1229 = vpack.c.b16 %v1183, %v1181
    %v1230 = vpack.c.b16 %v1186, %v1184
    %v1231 = vpack.c.b16 %v1187, %v1185
    %v1232 = vpack.c.b16 %v1190, %v1188
    %v1233 = vpack.c.b16 %v1191, %v1189
    %v1234 = vpack.c.b16 %v1194, %v1192
    %v1235 = vpack.c.b16 %v1195, %v1193
    %v1236 = vpack.c.b16 %v1198, %v1196
    %v1237 = vpack.c.b16 %v1199, %v1197
    %v1238 = vpack.c.b16 %v1202, %v1200
    %v1239 = vpack.c.b16 %v1203, %v1201
    %v1240 = vpack.c.b16 %v1206, %v1204
    %v1241 = vpack.c.b16 %v1207, %v1205
    %v1242 = vpack.c.b16 %v1210, %v1208
    %v1243 = vpack.c.b16 %v1211, %v1209
    %1276 = vmatpush.bf16.msra.mxu0 %v1226
    %1277 = vmatpush.bf16.msra.mxu0 %v1224
    %1278 = vmatpush.bf16.msra.mxu0 %v1222
    %1279 = vmatpush.bf16.msra.mxu0 %v1220
    %1280 = vmatpush.bf16.msra.mxu0 %v1218
    %1281 = vmatpush.bf16.msra.mxu0 %v1216
    %1282 = vmatpush.bf16.msra.mxu0 %v1214
    %1283 = vmatpush.bf16.msra.mxu0 %v1212
    %1284 = vmatmul.bf16.gmra.mxu0 %v1074
    %v1285 = vpop.f32.mrf.mxu0
    %v1286 = vadd.f32 %v1112, %v1285
    %v1287 = vpop.f32.mrf.mxu0
    %1288 = vdwg.mxu0
    %1289 = vmatpush.bf16.msra.mxu0 %v1242
    %1290 = vmatpush.bf16.msra.mxu0 %v1240
    %1291 = vmatpush.bf16.msra.mxu0 %v1238
    %1292 = vmatpush.bf16.msra.mxu0 %v1236
    %1293 = vmatpush.bf16.msra.mxu0 %v1234
    %1294 = vmatpush.bf16.msra.mxu0 %v1232
    %1295 = vmatpush.bf16.msra.mxu0 %v1230
    %1296 = vmatpush.bf16.msra.mxu0 %v1228
    %1297 = vmatmul.bf16.gmra.mxu0 %v1075
    %v1298 = vpop.f32.mrf.mxu0
    %v1299 = vadd.f32 %v1286, %v1298
    %v1300 = vpop.f32.mrf.mxu0
    %1301 = vdwg.mxu0
    %1302 = vmatpush.bf16.msra.mxu0 %v1227
    %1303 = vmatpush.bf16.msra.mxu0 %v1225
    %1304 = vmatpush.bf16.msra.mxu0 %v1223
    %1305 = vmatpush.bf16.msra.mxu0 %v1221
    %1306 = vmatpush.bf16.msra.mxu0 %v1219
    %1307 = vmatpush.bf16.msra.mxu0 %v1217
    %1308 = vmatpush.bf16.msra.mxu0 %v1215
    %1309 = vmatpush.bf16.msra.mxu0 %v1213
    %1310 = vmatmul.bf16.gmra.mxu0 %v1074
    %v1311 = vpop.f32.mrf.mxu0
    %v1312 = vadd.f32 %v1113, %v1311
    %v1313 = vpop.f32.mrf.mxu0
    %1314 = vdwg.mxu0
    %1315 = vmatpush.bf16.msra.mxu0 %v1243
    %1316 = vmatpush.bf16.msra.mxu0 %v1241
    %1317 = vmatpush.bf16.msra.mxu0 %v1239
    %1318 = vmatpush.bf16.msra.mxu0 %v1237
    %1319 = vmatpush.bf16.msra.mxu0 %v1235
    %1320 = vmatpush.bf16.msra.mxu0 %v1233
    %1321 = vmatpush.bf16.msra.mxu0 %v1231
    %1322 = vmatpush.bf16.msra.mxu0 %v1229
    %1323 = vmatmul.bf16.gmra.mxu0 %v1075
    %v1324 = vpop.f32.mrf.mxu0
    %v1325 = vadd.f32 %v1312, %v1324
    %v1326 = vpop.f32.mrf.mxu0
    %1327 = vdwg.mxu0
    %v1328 = vmax.f32 %v1299, 0.0
    %v1329 = vmax.f32 %v1325, 0.0
    %v1330 = vpack.c.bf16 %v1328, %v1328
    %v1331 = vpack.c.bf16 %v1329, %v1329
    %s1332 = scalar_lea.vmem [#allocation2], 1280
    %v1333 = vld [vmem:[%s1332] sm:$0xff]
    %v1334 = vld [vmem:[%s1332 + $0x8] sm:$0xff]
    %v1335 = vld [vmem:[%s1332 + $0x10] sm:$0xff]
    %v1336 = vld [vmem:[%s1332 + $0x18] sm:$0xff]
    %v1337 = vld [vmem:[%s1332 + $0x20] sm:$0xff]
    %v1338 = vld [vmem:[%s1332 + $0x28] sm:$0xff]
    %v1339 = vld [vmem:[%s1332 + $0x30] sm:$0xff]
    %v1340 = vld [vmem:[%s1332 + $0x38] sm:$0xff]
    %v1341 = vld [vmem:[%s1332 + $0x40] sm:$0xff]
    %v1342 = vld [vmem:[%s1332 + $0x48] sm:$0xff]
    %v1343 = vld [vmem:[%s1332 + $0x50] sm:$0xff]
    %v1344 = vld [vmem:[%s1332 + $0x58] sm:$0xff]
    %v1345 = vld [vmem:[%s1332 + $0x60] sm:$0xff]
    %v1346 = vld [vmem:[%s1332 + $0x68] sm:$0xff]
    %v1347 = vld [vmem:[%s1332 + $0x70] sm:$0xff]
    %v1348 = vld [vmem:[%s1332 + $0x78] sm:$0xff]
    %v1349 = vld [vmem:[%s1332 + $0x80] sm:$0xff]
    %v1350 = vld [vmem:[%s1332 + $0x88] sm:$0xff]
    %v1351 = vld [vmem:[%s1332 + $0x90] sm:$0xff]
    %v1352 = vld [vmem:[%s1332 + $0x98] sm:$0xff]
    %v1353 = vld [vmem:[%s1332 + $0xa0] sm:$0xff]
    %v1354 = vld [vmem:[%s1332 + $0xa8] sm:$0xff]
    %v1355 = vld [vmem:[%s1332 + $0xb0] sm:$0xff]
    %v1356 = vld [vmem:[%s1332 + $0xb8] sm:$0xff]
    %v1357 = vld [vmem:[%s1332 + $0xc0] sm:$0xff]
    %v1358 = vld [vmem:[%s1332 + $0xc8] sm:$0xff]
    %v1359 = vld [vmem:[%s1332 + $0xd0] sm:$0xff]
    %v1360 = vld [vmem:[%s1332 + $0xd8] sm:$0xff]
    %v1361 = vld [vmem:[%s1332 + $0xe0] sm:$0xff]
    %v1362 = vld [vmem:[%s1332 + $0xe8] sm:$0xff]
    %v1363 = vld [vmem:[%s1332 + $0xf0] sm:$0xff]
    %v1364 = vld [vmem:[%s1332 + $0xf8] sm:$0xff]
    %s1365 = scalar_lea.vmem [#allocation4], 5
    %v1366 = vld [vmem:[%s1365] ss:$8 sm:$0x3]
    %v1368 = vperm.slane %v1366, 0
    %v1369 = vperm.slane %v1366, 1
    %v1404 = vunpack.c.l.b16 %v1333
    %v1405 = vunpack.c.h.b16 %v1333
    %v1406 = vunpack.c.l.b16 %v1334
    %v1407 = vunpack.c.h.b16 %v1334
    %v1408 = vunpack.c.l.b16 %v1335
    %v1409 = vunpack.c.h.b16 %v1335
    %v1410 = vunpack.c.l.b16 %v1336
    %v1411 = vunpack.c.h.b16 %v1336
    %v1412 = vunpack.c.l.b16 %v1337
    %v1413 = vunpack.c.h.b16 %v1337
    %v1414 = vunpack.c.l.b16 %v1338
    %v1415 = vunpack.c.h.b16 %v1338
    %v1416 = vunpack.c.l.b16 %v1339
    %v1417 = vunpack.c.h.b16 %v1339
    %v1418 = vunpack.c.l.b16 %v1340
    %v1419 = vunpack.c.h.b16 %v1340
    %v1420 = vunpack.c.l.b16 %v1341
    %v1421 = vunpack.c.h.b16 %v1341
    %v1422 = vunpack.c.l.b16 %v1342
    %v1423 = vunpack.c.h.b16 %v1342
    %v1424 = vunpack.c.l.b16 %v1343
    %v1425 = vunpack.c.h.b16 %v1343
    %v1426 = vunpack.c.l.b16 %v1344
    %v1427 = vunpack.c.h.b16 %v1344
    %v1428 = vunpack.c.l.b16 %v1345
    %v1429 = vunpack.c.h.b16 %v1345
    %v1430 = vunpack.c.l.b16 %v1346
    %v1431 = vunpack.c.h.b16 %v1346
    %v1432 = vunpack.c.l.b16 %v1347
    %v1433 = vunpack.c.h.b16 %v1347
    %v1434 = vunpack.c.l.b16 %v1348
    %v1435 = vunpack.c.h.b16 %v1348
    %v1436 = vunpack.c.l.b16 %v1349
    %v1437 = vunpack.c.h.b16 %v1349
    %v1438 = vunpack.c.l.b16 %v1350
    %v1439 = vunpack.c.h.b16 %v1350
    %v1440 = vunpack.c.l.b16 %v1351
    %v1441 = vunpack.c.h.b16 %v1351
    %v1442 = vunpack.c.l.b16 %v1352
    %v1443 = vunpack.c.h.b16 %v1352
    %v1444 = vunpack.c.l.b16 %v1353
    %v1445 = vunpack.c.h.b16 %v1353
    %v1446 = vunpack.c.l.b16 %v1354
    %v1447 = vunpack.c.h.b16 %v1354
    %v1448 = vunpack.c.l.b16 %v1355
    %v1449 = vunpack.c.h.b16 %v1355
    %v1450 = vunpack.c.l.b16 %v1356
    %v1451 = vunpack.c.h.b16 %v1356
    %v1452 = vunpack.c.l.b16 %v1357
    %v1453 = vunpack.c.h.b16 %v1357
    %v1454 = vunpack.c.l.b16 %v1358
    %v1455 = vunpack.c.h.b16 %v1358
    %v1456 = vunpack.c.l.b16 %v1359
    %v1457 = vunpack.c.h.b16 %v1359
    %v1458 = vunpack.c.l.b16 %v1360
    %v1459 = vunpack.c.h.b16 %v1360
    %v1460 = vunpack.c.l.b16 %v1361
    %v1461 = vunpack.c.h.b16 %v1361
    %v1462 = vunpack.c.l.b16 %v1362
    %v1463 = vunpack.c.h.b16 %v1362
    %v1464 = vunpack.c.l.b16 %v1363
    %v1465 = vunpack.c.h.b16 %v1363
    %v1466 = vunpack.c.l.b16 %v1364
    %v1467 = vunpack.c.h.b16 %v1364
    %v1468 = vpack.c.b16 %v1406, %v1404
    %v1469 = vpack.c.b16 %v1407, %v1405
    %v1470 = vpack.c.b16 %v1410, %v1408
    %v1471 = vpack.c.b16 %v1411, %v1409
    %v1472 = vpack.c.b16 %v1414, %v1412
    %v1473 = vpack.c.b16 %v1415, %v1413
    %v1474 = vpack.c.b16 %v1418, %v1416
    %v1475 = vpack.c.b16 %v1419, %v1417
    %v1476 = vpack.c.b16 %v1422, %v1420
    %v1477 = vpack.c.b16 %v1423, %v1421
    %v1478 = vpack.c.b16 %v1426, %v1424
    %v1479 = vpack.c.b16 %v1427, %v1425
    %v1480 = vpack.c.b16 %v1430, %v1428
    %v1481 = vpack.c.b16 %v1431, %v1429
    %v1482 = vpack.c.b16 %v1434, %v1432
    %v1483 = vpack.c.b16 %v1435, %v1433
    %v1484 = vpack.c.b16 %v1438, %v1436
    %v1485 = vpack.c.b16 %v1439, %v1437
    %v1486 = vpack.c.b16 %v1442, %v1440
    %v1487 = vpack.c.b16 %v1443, %v1441
    %v1488 = vpack.c.b16 %v1446, %v1444
    %v1489 = vpack.c.b16 %v1447, %v1445
    %v1490 = vpack.c.b16 %v1450, %v1448
    %v1491 = vpack.c.b16 %v1451, %v1449
    %v1492 = vpack.c.b16 %v1454, %v1452
    %v1493 = vpack.c.b16 %v1455, %v1453
    %v1494 = vpack.c.b16 %v1458, %v1456
    %v1495 = vpack.c.b16 %v1459, %v1457
    %v1496 = vpack.c.b16 %v1462, %v1460
    %v1497 = vpack.c.b16 %v1463, %v1461
    %v1498 = vpack.c.b16 %v1466, %v1464
    %v1499 = vpack.c.b16 %v1467, %v1465
    %1532 = vmatpush.bf16.msra.mxu0 %v1482
    %1533 = vmatpush.bf16.msra.mxu0 %v1480
    %1534 = vmatpush.bf16.msra.mxu0 %v1478
    %1535 = vmatpush.bf16.msra.mxu0 %v1476
    %1536 = vmatpush.bf16.msra.mxu0 %v1474
    %1537 = vmatpush.bf16.msra.mxu0 %v1472
    %1538 = vmatpush.bf16.msra.mxu0 %v1470
    %1539 = vmatpush.bf16.msra.mxu0 %v1468
    %1540 = vmatmul.bf16.gmra.mxu0 %v1330
    %v1541 = vpop.f32.mrf.mxu0
    %v1542 = vadd.f32 %v1368, %v1541
    %v1543 = vpop.f32.mrf.mxu0
    %1544 = vdwg.mxu0
    %1545 = vmatpush.bf16.msra.mxu0 %v1498
    %1546 = vmatpush.bf16.msra.mxu0 %v1496
    %1547 = vmatpush.bf16.msra.mxu0 %v1494
    %1548 = vmatpush.bf16.msra.mxu0 %v1492
    %1549 = vmatpush.bf16.msra.mxu0 %v1490
    %1550 = vmatpush.bf16.msra.mxu0 %v1488
    %1551 = vmatpush.bf16.msra.mxu0 %v1486
    %1552 = vmatpush.bf16.msra.mxu0 %v1484
    %1553 = vmatmul.bf16.gmra.mxu0 %v1331
    %v1554 = vpop.f32.mrf.mxu0
    %v1555 = vadd.f32 %v1542, %v1554
    %v1556 = vpop.f32.mrf.mxu0
    %1557 = vdwg.mxu0
    %1558 = vmatpush.bf16.msra.mxu0 %v1483
    %1559 = vmatpush.bf16.msra.mxu0 %v1481
    %1560 = vmatpush.bf16.msra.mxu0 %v1479
    %1561 = vmatpush.bf16.msra.mxu0 %v1477
    %1562 = vmatpush.bf16.msra.mxu0 %v1475
    %1563 = vmatpush.bf16.msra.mxu0 %v1473
    %1564 = vmatpush.bf16.msra.mxu0 %v1471
    %1565 = vmatpush.bf16.msra.mxu0 %v1469
    %1566 = vmatmul.bf16.gmra.mxu0 %v1330
    %v1567 = vpop.f32.mrf.mxu0
    %v1568 = vadd.f32 %v1369, %v1567
    %v1569 = vpop.f32.mrf.mxu0
    %1570 = vdwg.mxu0
    %1571 = vmatpush.bf16.msra.mxu0 %v1499
    %1572 = vmatpush.bf16.msra.mxu0 %v1497
    %1573 = vmatpush.bf16.msra.mxu0 %v1495
    %1574 = vmatpush.bf16.msra.mxu0 %v1493
    %1575 = vmatpush.bf16.msra.mxu0 %v1491
    %1576 = vmatpush.bf16.msra.mxu0 %v1489
    %1577 = vmatpush.bf16.msra.mxu0 %v1487
    %1578 = vmatpush.bf16.msra.mxu0 %v1485
    %1579 = vmatmul.bf16.gmra.mxu0 %v1331
    %v1580 = vpop.f32.mrf.mxu0
    %v1581 = vadd.f32 %v1568, %v1580
    %v1582 = vpop.f32.mrf.mxu0
    %1583 = vdwg.mxu0
    %v1584 = vmax.f32 %v1555, 0.0
    %v1585 = vmax.f32 %v1581, 0.0
    %v1586 = vpack.c.bf16 %v1584, %v1584
    %v1587 = vpack.c.bf16 %v1585, %v1585
    %s1588 = scalar_lea.vmem [#allocation2], 1536
    %v1589 = vld [vmem:[%s1588] sm:$0xff]
    %v1590 = vld [vmem:[%s1588 + $0x8] sm:$0xff]
    %v1591 = vld [vmem:[%s1588 + $0x10] sm:$0xff]
    %v1592 = vld [vmem:[%s1588 + $0x18] sm:$0xff]
    %v1593 = vld [vmem:[%s1588 + $0x20] sm:$0xff]
    %v1594 = vld [vmem:[%s1588 + $0x28] sm:$0xff]
    %v1595 = vld [vmem:[%s1588 + $0x30] sm:$0xff]
    %v1596 = vld [vmem:[%s1588 + $0x38] sm:$0xff]
    %v1597 = vld [vmem:[%s1588 + $0x40] sm:$0xff]
    %v1598 = vld [vmem:[%s1588 + $0x48] sm:$0xff]
    %v1599 = vld [vmem:[%s1588 + $0x50] sm:$0xff]
    %v1600 = vld [vmem:[%s1588 + $0x58] sm:$0xff]
    %v1601 = vld [vmem:[%s1588 + $0x60] sm:$0xff]
    %v1602 = vld [vmem:[%s1588 + $0x68] sm:$0xff]
    %v1603 = vld [vmem:[%s1588 + $0x70] sm:$0xff]
    %v1604 = vld [vmem:[%s1588 + $0x78] sm:$0xff]
    %v1605 = vld [vmem:[%s1588 + $0x80] sm:$0xff]
    %v1606 = vld [vmem:[%s1588 + $0x88] sm:$0xff]
    %v1607 = vld [vmem:[%s1588 + $0x90] sm:$0xff]
    %v1608 = vld [vmem:[%s1588 + $0x98] sm:$0xff]
    %v1609 = vld [vmem:[%s1588 + $0xa0] sm:$0xff]
    %v1610 = vld [vmem:[%s1588 + $0xa8] sm:$0xff]
    %v1611 = vld [vmem:[%s1588 + $0xb0] sm:$0xff]
    %v1612 = vld [vmem:[%s1588 + $0xb8] sm:$0xff]
    %v1613 = vld [vmem:[%s1588 + $0xc0] sm:$0xff]
    %v1614 = vld [vmem:[%s1588 + $0xc8] sm:$0xff]
    %v1615 = vld [vmem:[%s1588 + $0xd0] sm:$0xff]
    %v1616 = vld [vmem:[%s1588 + $0xd8] sm:$0xff]
    %v1617 = vld [vmem:[%s1588 + $0xe0] sm:$0xff]
    %v1618 = vld [vmem:[%s1588 + $0xe8] sm:$0xff]
    %v1619 = vld [vmem:[%s1588 + $0xf0] sm:$0xff]
    %v1620 = vld [vmem:[%s1588 + $0xf8] sm:$0xff]
    %s1621 = scalar_lea.vmem [#allocation4], 6
    %v1622 = vld [vmem:[%s1621] ss:$8 sm:$0x3]
    %v1624 = vperm.slane %v1622, 0
    %v1658 = vunpack.c.l.b16 %v1589
    %v1659 = vunpack.c.l.b16 %v1590
    %v1660 = vunpack.c.l.b16 %v1591
    %v1661 = vunpack.c.l.b16 %v1592
    %v1662 = vunpack.c.l.b16 %v1593
    %v1663 = vunpack.c.l.b16 %v1594
    %v1664 = vunpack.c.l.b16 %v1595
    %v1665 = vunpack.c.l.b16 %v1596
    %v1666 = vunpack.c.l.b16 %v1597
    %v1667 = vunpack.c.l.b16 %v1598
    %v1668 = vunpack.c.l.b16 %v1599
    %v1669 = vunpack.c.l.b16 %v1600
    %v1670 = vunpack.c.l.b16 %v1601
    %v1671 = vunpack.c.l.b16 %v1602
    %v1672 = vunpack.c.l.b16 %v1603
    %v1673 = vunpack.c.l.b16 %v1604
    %v1674 = vunpack.c.l.b16 %v1605
    %v1675 = vunpack.c.l.b16 %v1606
    %v1676 = vunpack.c.l.b16 %v1607
    %v1677 = vunpack.c.l.b16 %v1608
    %v1678 = vunpack.c.l.b16 %v1609
    %v1679 = vunpack.c.l.b16 %v1610
    %v1680 = vunpack.c.l.b16 %v1611
    %v1681 = vunpack.c.l.b16 %v1612
    %v1682 = vunpack.c.l.b16 %v1613
    %v1683 = vunpack.c.l.b16 %v1614
    %v1684 = vunpack.c.l.b16 %v1615
    %v1685 = vunpack.c.l.b16 %v1616
    %v1686 = vunpack.c.l.b16 %v1617
    %v1687 = vunpack.c.l.b16 %v1618
    %v1688 = vunpack.c.l.b16 %v1619
    %v1689 = vunpack.c.l.b16 %v1620
    %v1690 = vpack.c.b16 %v1659, %v1658
    %v1691 = vpack.c.b16 %v1661, %v1660
    %v1692 = vpack.c.b16 %v1663, %v1662
    %v1693 = vpack.c.b16 %v1665, %v1664
    %v1694 = vpack.c.b16 %v1667, %v1666
    %v1695 = vpack.c.b16 %v1669, %v1668
    %v1696 = vpack.c.b16 %v1671, %v1670
    %v1697 = vpack.c.b16 %v1673, %v1672
    %v1698 = vpack.c.b16 %v1675, %v1674
    %v1699 = vpack.c.b16 %v1677, %v1676
    %v1700 = vpack.c.b16 %v1679, %v1678
    %v1701 = vpack.c.b16 %v1681, %v1680
    %v1702 = vpack.c.b16 %v1683, %v1682
    %v1703 = vpack.c.b16 %v1685, %v1684
    %v1704 = vpack.c.b16 %v1687, %v1686
    %v1705 = vpack.c.b16 %v1689, %v1688
    %1722 = vmatpush.bf16.msra.mxu0 %v1697
    %1723 = vmatpush.bf16.msra.mxu0 %v1696
    %1724 = vmatpush.bf16.msra.mxu0 %v1695
    %1725 = vmatpush.bf16.msra.mxu0 %v1694
    %1726 = vmatpush.bf16.msra.mxu0 %v1693
    %1727 = vmatpush.bf16.msra.mxu0 %v1692
    %1728 = vmatpush.bf16.msra.mxu0 %v1691
    %1729 = vmatpush.bf16.msra.mxu0 %v1690
    %1730 = vmatmul.bf16.gmra.mxu0 %v1586
    %v1731 = vpop.f32.mrf.mxu0
    %v1732 = vadd.f32 %v1624, %v1731
    %v1733 = vpop.f32.mrf.mxu0
    %1734 = vdwg.mxu0
    %1735 = vmatpush.bf16.msra.mxu0 %v1705
    %1736 = vmatpush.bf16.msra.mxu0 %v1704
    %1737 = vmatpush.bf16.msra.mxu0 %v1703
    %1738 = vmatpush.bf16.msra.mxu0 %v1702
    %1739 = vmatpush.bf16.msra.mxu0 %v1701
    %1740 = vmatpush.bf16.msra.mxu0 %v1700
    %1741 = vmatpush.bf16.msra.mxu0 %v1699
    %1742 = vmatpush.bf16.msra.mxu0 %v1698
    %1743 = vmatmul.bf16.gmra.mxu0 %v1587
    %v1744 = vpop.f32.mrf.mxu0
    %v1745 = vadd.f32 %v1732, %v1744
    %v1746 = vpop.f32.mrf.mxu0
    %1747 = vdwg.mxu0
    %s1748 = scalar_lea.vmem [#allocation2], 1792
    %v1749 = vld [vmem:[%s1748] sm:$0xff]
    %v1750 = vld [vmem:[%s1748 + $0x8] sm:$0xff]
    %v1751 = vld [vmem:[%s1748 + $0x10] sm:$0xff]
    %v1752 = vld [vmem:[%s1748 + $0x18] sm:$0xff]
    %v1753 = vld [vmem:[%s1748 + $0x20] sm:$0xff]
    %v1754 = vld [vmem:[%s1748 + $0x28] sm:$0xff]
    %v1755 = vld [vmem:[%s1748 + $0x30] sm:$0xff]
    %v1756 = vld [vmem:[%s1748 + $0x38] sm:$0xff]
    %v1757 = vld [vmem:[%s1748 + $0x40] sm:$0xff]
    %v1758 = vld [vmem:[%s1748 + $0x48] sm:$0xff]
    %v1759 = vld [vmem:[%s1748 + $0x50] sm:$0xff]
    %v1760 = vld [vmem:[%s1748 + $0x58] sm:$0xff]
    %v1761 = vld [vmem:[%s1748 + $0x60] sm:$0xff]
    %v1762 = vld [vmem:[%s1748 + $0x68] sm:$0xff]
    %v1763 = vld [vmem:[%s1748 + $0x70] sm:$0xff]
    %v1764 = vld [vmem:[%s1748 + $0x78] sm:$0xff]
    %v1765 = vld [vmem:[%s1748 + $0x80] sm:$0xff]
    %v1766 = vld [vmem:[%s1748 + $0x88] sm:$0xff]
    %v1767 = vld [vmem:[%s1748 + $0x90] sm:$0xff]
    %v1768 = vld [vmem:[%s1748 + $0x98] sm:$0xff]
    %v1769 = vld [vmem:[%s1748 + $0xa0] sm:$0xff]
    %v1770 = vld [vmem:[%s1748 + $0xa8] sm:$0xff]
    %v1771 = vld [vmem:[%s1748 + $0xb0] sm:$0xff]
    %v1772 = vld [vmem:[%s1748 + $0xb8] sm:$0xff]
    %v1773 = vld [vmem:[%s1748 + $0xc0] sm:$0xff]
    %v1774 = vld [vmem:[%s1748 + $0xc8] sm:$0xff]
    %v1775 = vld [vmem:[%s1748 + $0xd0] sm:$0xff]
    %v1776 = vld [vmem:[%s1748 + $0xd8] sm:$0xff]
    %v1777 = vld [vmem:[%s1748 + $0xe0] sm:$0xff]
    %v1778 = vld [vmem:[%s1748 + $0xe8] sm:$0xff]
    %v1779 = vld [vmem:[%s1748 + $0xf0] sm:$0xff]
    %v1780 = vld [vmem:[%s1748 + $0xf8] sm:$0xff]
    %s1781 = scalar_lea.vmem [#allocation4], 7
    %v1782 = vld [vmem:[%s1781] ss:$8 sm:$0x3]
    %v1784 = vperm.slane %v1782, 0
    %v1785 = vperm.slane %v1782, 1
    %v1820 = vunpack.c.l.b16 %v1749
    %v1821 = vunpack.c.h.b16 %v1749
    %v1822 = vunpack.c.l.b16 %v1750
    %v1823 = vunpack.c.h.b16 %v1750
    %v1824 = vunpack.c.l.b16 %v1751
    %v1825 = vunpack.c.h.b16 %v1751
    %v1826 = vunpack.c.l.b16 %v1752
    %v1827 = vunpack.c.h.b16 %v1752
    %v1828 = vunpack.c.l.b16 %v1753
    %v1829 = vunpack.c.h.b16 %v1753
    %v1830 = vunpack.c.l.b16 %v1754
    %v1831 = vunpack.c.h.b16 %v1754
    %v1832 = vunpack.c.l.b16 %v1755
    %v1833 = vunpack.c.h.b16 %v1755
    %v1834 = vunpack.c.l.b16 %v1756
    %v1835 = vunpack.c.h.b16 %v1756
    %v1836 = vunpack.c.l.b16 %v1757
    %v1837 = vunpack.c.h.b16 %v1757
    %v1838 = vunpack.c.l.b16 %v1758
    %v1839 = vunpack.c.h.b16 %v1758
    %v1840 = vunpack.c.l.b16 %v1759
    %v1841 = vunpack.c.h.b16 %v1759
    %v1842 = vunpack.c.l.b16 %v1760
    %v1843 = vunpack.c.h.b16 %v1760
    %v1844 = vunpack.c.l.b16 %v1761
    %v1845 = vunpack.c.h.b16 %v1761
    %v1846 = vunpack.c.l.b16 %v1762
    %v1847 = vunpack.c.h.b16 %v1762
    %v1848 = vunpack.c.l.b16 %v1763
    %v1849 = vunpack.c.h.b16 %v1763
    %v1850 = vunpack.c.l.b16 %v1764
    %v1851 = vunpack.c.h.b16 %v1764
    %v1852 = vunpack.c.l.b16 %v1765
    %v1853 = vunpack.c.h.b16 %v1765
    %v1854 = vunpack.c.l.b16 %v1766
    %v1855 = vunpack.c.h.b16 %v1766
    %v1856 = vunpack.c.l.b16 %v1767
    %v1857 = vunpack.c.h.b16 %v1767
    %v1858 = vunpack.c.l.b16 %v1768
    %v1859 = vunpack.c.h.b16 %v1768
    %v1860 = vunpack.c.l.b16 %v1769
    %v1861 = vunpack.c.h.b16 %v1769
    %v1862 = vunpack.c.l.b16 %v1770
    %v1863 = vunpack.c.h.b16 %v1770
    %v1864 = vunpack.c.l.b16 %v1771
    %v1865 = vunpack.c.h.b16 %v1771
    %v1866 = vunpack.c.l.b16 %v1772
    %v1867 = vunpack.c.h.b16 %v1772
    %v1868 = vunpack.c.l.b16 %v1773
    %v1869 = vunpack.c.h.b16 %v1773
    %v1870 = vunpack.c.l.b16 %v1774
    %v1871 = vunpack.c.h.b16 %v1774
    %v1872 = vunpack.c.l.b16 %v1775
    %v1873 = vunpack.c.h.b16 %v1775
    %v1874 = vunpack.c.l.b16 %v1776
    %v1875 = vunpack.c.h.b16 %v1776
    %v1876 = vunpack.c.l.b16 %v1777
    %v1877 = vunpack.c.h.b16 %v1777
    %v1878 = vunpack.c.l.b16 %v1778
    %v1879 = vunpack.c.h.b16 %v1778
    %v1880 = vunpack.c.l.b16 %v1779
    %v1881 = vunpack.c.h.b16 %v1779
    %v1882 = vunpack.c.l.b16 %v1780
    %v1883 = vunpack.c.h.b16 %v1780
    %v1884 = vpack.c.b16 %v1822, %v1820
    %v1885 = vpack.c.b16 %v1823, %v1821
    %v1886 = vpack.c.b16 %v1826, %v1824
    %v1887 = vpack.c.b16 %v1827, %v1825
    %v1888 = vpack.c.b16 %v1830, %v1828
    %v1889 = vpack.c.b16 %v1831, %v1829
    %v1890 = vpack.c.b16 %v1834, %v1832
    %v1891 = vpack.c.b16 %v1835, %v1833
    %v1892 = vpack.c.b16 %v1838, %v1836
    %v1893 = vpack.c.b16 %v1839, %v1837
    %v1894 = vpack.c.b16 %v1842, %v1840
    %v1895 = vpack.c.b16 %v1843, %v1841
    %v1896 = vpack.c.b16 %v1846, %v1844
    %v1897 = vpack.c.b16 %v1847, %v1845
    %v1898 = vpack.c.b16 %v1850, %v1848
    %v1899 = vpack.c.b16 %v1851, %v1849
    %v1900 = vpack.c.b16 %v1854, %v1852
    %v1901 = vpack.c.b16 %v1855, %v1853
    %v1902 = vpack.c.b16 %v1858, %v1856
    %v1903 = vpack.c.b16 %v1859, %v1857
    %v1904 = vpack.c.b16 %v1862, %v1860
    %v1905 = vpack.c.b16 %v1863, %v1861
    %v1906 = vpack.c.b16 %v1866, %v1864
    %v1907 = vpack.c.b16 %v1867, %v1865
    %v1908 = vpack.c.b16 %v1870, %v1868
    %v1909 = vpack.c.b16 %v1871, %v1869
    %v1910 = vpack.c.b16 %v1874, %v1872
    %v1911 = vpack.c.b16 %v1875, %v1873
    %v1912 = vpack.c.b16 %v1878, %v1876
    %v1913 = vpack.c.b16 %v1879, %v1877
    %v1914 = vpack.c.b16 %v1882, %v1880
    %v1915 = vpack.c.b16 %v1883, %v1881
    %1948 = vmatpush.bf16.msra.mxu0 %v1898
    %1949 = vmatpush.bf16.msra.mxu0 %v1896
    %1950 = vmatpush.bf16.msra.mxu0 %v1894
    %1951 = vmatpush.bf16.msra.mxu0 %v1892
    %1952 = vmatpush.bf16.msra.mxu0 %v1890
    %1953 = vmatpush.bf16.msra.mxu0 %v1888
    %1954 = vmatpush.bf16.msra.mxu0 %v1886
    %1955 = vmatpush.bf16.msra.mxu0 %v1884
    %1956 = vmatmul.bf16.gmra.mxu0 %v1074
    %v1957 = vpop.f32.mrf.mxu0
    %v1958 = vadd.f32 %v1784, %v1957
    %v1959 = vpop.f32.mrf.mxu0
    %1960 = vdwg.mxu0
    %1961 = vmatpush.bf16.msra.mxu0 %v1914
    %1962 = vmatpush.bf16.msra.mxu0 %v1912
    %1963 = vmatpush.bf16.msra.mxu0 %v1910
    %1964 = vmatpush.bf16.msra.mxu0 %v1908
    %1965 = vmatpush.bf16.msra.mxu0 %v1906
    %1966 = vmatpush.bf16.msra.mxu0 %v1904
    %1967 = vmatpush.bf16.msra.mxu0 %v1902
    %1968 = vmatpush.bf16.msra.mxu0 %v1900
    %1969 = vmatmul.bf16.gmra.mxu0 %v1075
    %v1970 = vpop.f32.mrf.mxu0
    %v1971 = vadd.f32 %v1958, %v1970
    %v1972 = vpop.f32.mrf.mxu0
    %1973 = vdwg.mxu0
    %1974 = vmatpush.bf16.msra.mxu0 %v1899
    %1975 = vmatpush.bf16.msra.mxu0 %v1897
    %1976 = vmatpush.bf16.msra.mxu0 %v1895
    %1977 = vmatpush.bf16.msra.mxu0 %v1893
    %1978 = vmatpush.bf16.msra.mxu0 %v1891
    %1979 = vmatpush.bf16.msra.mxu0 %v1889
    %1980 = vmatpush.bf16.msra.mxu0 %v1887
    %1981 = vmatpush.bf16.msra.mxu0 %v1885
    %1982 = vmatmul.bf16.gmra.mxu0 %v1074
    %v1983 = vpop.f32.mrf.mxu0
    %v1984 = vadd.f32 %v1785, %v1983
    %v1985 = vpop.f32.mrf.mxu0
    %1986 = vdwg.mxu0
    %1987 = vmatpush.bf16.msra.mxu0 %v1915
    %1988 = vmatpush.bf16.msra.mxu0 %v1913
    %1989 = vmatpush.bf16.msra.mxu0 %v1911
    %1990 = vmatpush.bf16.msra.mxu0 %v1909
    %1991 = vmatpush.bf16.msra.mxu0 %v1907
    %1992 = vmatpush.bf16.msra.mxu0 %v1905
    %1993 = vmatpush.bf16.msra.mxu0 %v1903
    %1994 = vmatpush.bf16.msra.mxu0 %v1901
    %1995 = vmatmul.bf16.gmra.mxu0 %v1075
    %v1996 = vpop.f32.mrf.mxu0
    %v1997 = vadd.f32 %v1984, %v1996
    %v1998 = vpop.f32.mrf.mxu0
    %1999 = vdwg.mxu0
    %v2000 = vmax.f32 %v1971, 0.0
    %v2001 = vmax.f32 %v1997, 0.0
    %v2002 = vpack.c.bf16 %v2000, %v2000
    %v2003 = vpack.c.bf16 %v2001, %v2001
    %s2004 = scalar_lea.vmem [#allocation2], 2048
    %v2005 = vld [vmem:[%s2004] sm:$0xff]
    %v2006 = vld [vmem:[%s2004 + $0x8] sm:$0xff]
    %v2007 = vld [vmem:[%s2004 + $0x10] sm:$0xff]
    %v2008 = vld [vmem:[%s2004 + $0x18] sm:$0xff]
    %v2009 = vld [vmem:[%s2004 + $0x20] sm:$0xff]
    %v2010 = vld [vmem:[%s2004 + $0x28] sm:$0xff]
    %v2011 = vld [vmem:[%s2004 + $0x30] sm:$0xff]
    %v2012 = vld [vmem:[%s2004 + $0x38] sm:$0xff]
    %v2013 = vld [vmem:[%s2004 + $0x40] sm:$0xff]
    %v2014 = vld [vmem:[%s2004 + $0x48] sm:$0xff]
    %v2015 = vld [vmem:[%s2004 + $0x50] sm:$0xff]
    %v2016 = vld [vmem:[%s2004 + $0x58] sm:$0xff]
    %v2017 = vld [vmem:[%s2004 + $0x60] sm:$0xff]
    %v2018 = vld [vmem:[%s2004 + $0x68] sm:$0xff]
    %v2019 = vld [vmem:[%s2004 + $0x70] sm:$0xff]
    %v2020 = vld [vmem:[%s2004 + $0x78] sm:$0xff]
    %v2021 = vld [vmem:[%s2004 + $0x80] sm:$0xff]
    %v2022 = vld [vmem:[%s2004 + $0x88] sm:$0xff]
    %v2023 = vld [vmem:[%s2004 + $0x90] sm:$0xff]
    %v2024 = vld [vmem:[%s2004 + $0x98] sm:$0xff]
    %v2025 = vld [vmem:[%s2004 + $0xa0] sm:$0xff]
    %v2026 = vld [vmem:[%s2004 + $0xa8] sm:$0xff]
    %v2027 = vld [vmem:[%s2004 + $0xb0] sm:$0xff]
    %v2028 = vld [vmem:[%s2004 + $0xb8] sm:$0xff]
    %v2029 = vld [vmem:[%s2004 + $0xc0] sm:$0xff]
    %v2030 = vld [vmem:[%s2004 + $0xc8] sm:$0xff]
    %v2031 = vld [vmem:[%s2004 + $0xd0] sm:$0xff]
    %v2032 = vld [vmem:[%s2004 + $0xd8] sm:$0xff]
    %v2033 = vld [vmem:[%s2004 + $0xe0] sm:$0xff]
    %v2034 = vld [vmem:[%s2004 + $0xe8] sm:$0xff]
    %v2035 = vld [vmem:[%s2004 + $0xf0] sm:$0xff]
    %v2036 = vld [vmem:[%s2004 + $0xf8] sm:$0xff]
    %s2037 = scalar_lea.vmem [#allocation4], 16
    %v2038 = vld [vmem:[%s2037] ss:$8 sm:$0x3]
    %v2040 = vperm.slane %v2038, 0
    %v2041 = vperm.slane %v2038, 1
    %v2076 = vunpack.c.l.b16 %v2005
    %v2077 = vunpack.c.h.b16 %v2005
    %v2078 = vunpack.c.l.b16 %v2006
    %v2079 = vunpack.c.h.b16 %v2006
    %v2080 = vunpack.c.l.b16 %v2007
    %v2081 = vunpack.c.h.b16 %v2007
    %v2082 = vunpack.c.l.b16 %v2008
    %v2083 = vunpack.c.h.b16 %v2008
    %v2084 = vunpack.c.l.b16 %v2009
    %v2085 = vunpack.c.h.b16 %v2009
    %v2086 = vunpack.c.l.b16 %v2010
    %v2087 = vunpack.c.h.b16 %v2010
    %v2088 = vunpack.c.l.b16 %v2011
    %v2089 = vunpack.c.h.b16 %v2011
    %v2090 = vunpack.c.l.b16 %v2012
    %v2091 = vunpack.c.h.b16 %v2012
    %v2092 = vunpack.c.l.b16 %v2013
    %v2093 = vunpack.c.h.b16 %v2013
    %v2094 = vunpack.c.l.b16 %v2014
    %v2095 = vunpack.c.h.b16 %v2014
    %v2096 = vunpack.c.l.b16 %v2015
    %v2097 = vunpack.c.h.b16 %v2015
    %v2098 = vunpack.c.l.b16 %v2016
    %v2099 = vunpack.c.h.b16 %v2016
    %v2100 = vunpack.c.l.b16 %v2017
    %v2101 = vunpack.c.h.b16 %v2017
    %v2102 = vunpack.c.l.b16 %v2018
    %v2103 = vunpack.c.h.b16 %v2018
    %v2104 = vunpack.c.l.b16 %v2019
    %v2105 = vunpack.c.h.b16 %v2019
    %v2106 = vunpack.c.l.b16 %v2020
    %v2107 = vunpack.c.h.b16 %v2020
    %v2108 = vunpack.c.l.b16 %v2021
    %v2109 = vunpack.c.h.b16 %v2021
    %v2110 = vunpack.c.l.b16 %v2022
    %v2111 = vunpack.c.h.b16 %v2022
    %v2112 = vunpack.c.l.b16 %v2023
    %v2113 = vunpack.c.h.b16 %v2023
    %v2114 = vunpack.c.l.b16 %v2024
    %v2115 = vunpack.c.h.b16 %v2024
    %v2116 = vunpack.c.l.b16 %v2025
    %v2117 = vunpack.c.h.b16 %v2025
    %v2118 = vunpack.c.l.b16 %v2026
    %v2119 = vunpack.c.h.b16 %v2026
    %v2120 = vunpack.c.l.b16 %v2027
    %v2121 = vunpack.c.h.b16 %v2027
    %v2122 = vunpack.c.l.b16 %v2028
    %v2123 = vunpack.c.h.b16 %v2028
    %v2124 = vunpack.c.l.b16 %v2029
    %v2125 = vunpack.c.h.b16 %v2029
    %v2126 = vunpack.c.l.b16 %v2030
    %v2127 = vunpack.c.h.b16 %v2030
    %v2128 = vunpack.c.l.b16 %v2031
    %v2129 = vunpack.c.h.b16 %v2031
    %v2130 = vunpack.c.l.b16 %v2032
    %v2131 = vunpack.c.h.b16 %v2032
    %v2132 = vunpack.c.l.b16 %v2033
    %v2133 = vunpack.c.h.b16 %v2033
    %v2134 = vunpack.c.l.b16 %v2034
    %v2135 = vunpack.c.h.b16 %v2034
    %v2136 = vunpack.c.l.b16 %v2035
    %v2137 = vunpack.c.h.b16 %v2035
    %v2138 = vunpack.c.l.b16 %v2036
    %v2139 = vunpack.c.h.b16 %v2036
    %v2140 = vpack.c.b16 %v2078, %v2076
    %v2141 = vpack.c.b16 %v2079, %v2077
    %v2142 = vpack.c.b16 %v2082, %v2080
    %v2143 = vpack.c.b16 %v2083, %v2081
    %v2144 = vpack.c.b16 %v2086, %v2084
    %v2145 = vpack.c.b16 %v2087, %v2085
    %v2146 = vpack.c.b16 %v2090, %v2088
    %v2147 = vpack.c.b16 %v2091, %v2089
    %v2148 = vpack.c.b16 %v2094, %v2092
    %v2149 = vpack.c.b16 %v2095, %v2093
    %v2150 = vpack.c.b16 %v2098, %v2096
    %v2151 = vpack.c.b16 %v2099, %v2097
    %v2152 = vpack.c.b16 %v2102, %v2100
    %v2153 = vpack.c.b16 %v2103, %v2101
    %v2154 = vpack.c.b16 %v2106, %v2104
    %v2155 = vpack.c.b16 %v2107, %v2105
    %v2156 = vpack.c.b16 %v2110, %v2108
    %v2157 = vpack.c.b16 %v2111, %v2109
    %v2158 = vpack.c.b16 %v2114, %v2112
    %v2159 = vpack.c.b16 %v2115, %v2113
    %v2160 = vpack.c.b16 %v2118, %v2116
    %v2161 = vpack.c.b16 %v2119, %v2117
    %v2162 = vpack.c.b16 %v2122, %v2120
    %v2163 = vpack.c.b16 %v2123, %v2121
    %v2164 = vpack.c.b16 %v2126, %v2124
    %v2165 = vpack.c.b16 %v2127, %v2125
    %v2166 = vpack.c.b16 %v2130, %v2128
    %v2167 = vpack.c.b16 %v2131, %v2129
    %v2168 = vpack.c.b16 %v2134, %v2132
    %v2169 = vpack.c.b16 %v2135, %v2133
    %v2170 = vpack.c.b16 %v2138, %v2136
    %v2171 = vpack.c.b16 %v2139, %v2137
    %2204 = vmatpush.bf16.msra.mxu0 %v2154
    %2205 = vmatpush.bf16.msra.mxu0 %v2152
    %2206 = vmatpush.bf16.msra.mxu0 %v2150
    %2207 = vmatpush.bf16.msra.mxu0 %v2148
    %2208 = vmatpush.bf16.msra.mxu0 %v2146
    %2209 = vmatpush.bf16.msra.mxu0 %v2144
    %2210 = vmatpush.bf16.msra.mxu0 %v2142
    %2211 = vmatpush.bf16.msra.mxu0 %v2140
    %2212 = vmatmul.bf16.gmra.mxu0 %v2002
    %v2213 = vpop.f32.mrf.mxu0
    %v2214 = vadd.f32 %v2040, %v2213
    %v2215 = vpop.f32.mrf.mxu0
    %2216 = vdwg.mxu0
    %2217 = vmatpush.bf16.msra.mxu0 %v2170
    %2218 = vmatpush.bf16.msra.mxu0 %v2168
    %2219 = vmatpush.bf16.msra.mxu0 %v2166
    %2220 = vmatpush.bf16.msra.mxu0 %v2164
    %2221 = vmatpush.bf16.msra.mxu0 %v2162
    %2222 = vmatpush.bf16.msra.mxu0 %v2160
    %2223 = vmatpush.bf16.msra.mxu0 %v2158
    %2224 = vmatpush.bf16.msra.mxu0 %v2156
    %2225 = vmatmul.bf16.gmra.mxu0 %v2003
    %v2226 = vpop.f32.mrf.mxu0
    %v2227 = vadd.f32 %v2214, %v2226
    %v2228 = vpop.f32.mrf.mxu0
    %2229 = vdwg.mxu0
    %2230 = vmatpush.bf16.msra.mxu0 %v2155
    %2231 = vmatpush.bf16.msra.mxu0 %v2153
    %2232 = vmatpush.bf16.msra.mxu0 %v2151
    %2233 = vmatpush.bf16.msra.mxu0 %v2149
    %2234 = vmatpush.bf16.msra.mxu0 %v2147
    %2235 = vmatpush.bf16.msra.mxu0 %v2145
    %2236 = vmatpush.bf16.msra.mxu0 %v2143
    %2237 = vmatpush.bf16.msra.mxu0 %v2141
    %2238 = vmatmul.bf16.gmra.mxu0 %v2002
    %v2239 = vpop.f32.mrf.mxu0
    %v2240 = vadd.f32 %v2041, %v2239
    %v2241 = vpop.f32.mrf.mxu0
    %2242 = vdwg.mxu0
    %2243 = vmatpush.bf16.msra.mxu0 %v2171
    %2244 = vmatpush.bf16.msra.mxu0 %v2169
    %2245 = vmatpush.bf16.msra.mxu0 %v2167
    %2246 = vmatpush.bf16.msra.mxu0 %v2165
    %2247 = vmatpush.bf16.msra.mxu0 %v2163
    %2248 = vmatpush.bf16.msra.mxu0 %v2161
    %2249 = vmatpush.bf16.msra.mxu0 %v2159
    %2250 = vmatpush.bf16.msra.mxu0 %v2157
    %2251 = vmatmul.bf16.gmra.mxu0 %v2003
    %v2252 = vpop.f32.mrf.mxu0
    %v2253 = vadd.f32 %v2240, %v2252
    %v2254 = vpop.f32.mrf.mxu0
    %2255 = vdwg.mxu0
    %v2256 = vmax.f32 %v2227, 0.0
    %v2257 = vmax.f32 %v2253, 0.0
    %v2258 = vpack.c.bf16 %v2256, %v2256
    %v2259 = vpack.c.bf16 %v2257, %v2257
    %s2260 = scalar_lea.vmem [#allocation2], 2304
    %v2261 = vld [vmem:[%s2260] sm:$0xff]
    %v2262 = vld [vmem:[%s2260 + $0x8] sm:$0xff]
    %v2263 = vld [vmem:[%s2260 + $0x10] sm:$0xff]
    %v2264 = vld [vmem:[%s2260 + $0x18] sm:$0xff]
    %v2265 = vld [vmem:[%s2260 + $0x20] sm:$0xff]
    %v2266 = vld [vmem:[%s2260 + $0x28] sm:$0xff]
    %v2267 = vld [vmem:[%s2260 + $0x30] sm:$0xff]
    %v2268 = vld [vmem:[%s2260 + $0x38] sm:$0xff]
    %v2269 = vld [vmem:[%s2260 + $0x40] sm:$0xff]
    %v2270 = vld [vmem:[%s2260 + $0x48] sm:$0xff]
    %v2271 = vld [vmem:[%s2260 + $0x50] sm:$0xff]
    %v2272 = vld [vmem:[%s2260 + $0x58] sm:$0xff]
    %v2273 = vld [vmem:[%s2260 + $0x60] sm:$0xff]
    %v2274 = vld [vmem:[%s2260 + $0x68] sm:$0xff]
    %v2275 = vld [vmem:[%s2260 + $0x70] sm:$0xff]
    %v2276 = vld [vmem:[%s2260 + $0x78] sm:$0xff]
    %v2277 = vld [vmem:[%s2260 + $0x80] sm:$0xff]
    %v2278 = vld [vmem:[%s2260 + $0x88] sm:$0xff]
    %v2279 = vld [vmem:[%s2260 + $0x90] sm:$0xff]
    %v2280 = vld [vmem:[%s2260 + $0x98] sm:$0xff]
    %v2281 = vld [vmem:[%s2260 + $0xa0] sm:$0xff]
    %v2282 = vld [vmem:[%s2260 + $0xa8] sm:$0xff]
    %v2283 = vld [vmem:[%s2260 + $0xb0] sm:$0xff]
    %v2284 = vld [vmem:[%s2260 + $0xb8] sm:$0xff]
    %v2285 = vld [vmem:[%s2260 + $0xc0] sm:$0xff]
    %v2286 = vld [vmem:[%s2260 + $0xc8] sm:$0xff]
    %v2287 = vld [vmem:[%s2260 + $0xd0] sm:$0xff]
    %v2288 = vld [vmem:[%s2260 + $0xd8] sm:$0xff]
    %v2289 = vld [vmem:[%s2260 + $0xe0] sm:$0xff]
    %v2290 = vld [vmem:[%s2260 + $0xe8] sm:$0xff]
    %v2291 = vld [vmem:[%s2260 + $0xf0] sm:$0xff]
    %v2292 = vld [vmem:[%s2260 + $0xf8] sm:$0xff]
    %s2293 = scalar_lea.vmem [#allocation4], 17
    %v2294 = vld [vmem:[%s2293] ss:$8 sm:$0x3]
    %v2296 = vperm.slane %v2294, 0
    %v2330 = vunpack.c.l.b16 %v2261
    %v2331 = vunpack.c.l.b16 %v2262
    %v2332 = vunpack.c.l.b16 %v2263
    %v2333 = vunpack.c.l.b16 %v2264
    %v2334 = vunpack.c.l.b16 %v2265
    %v2335 = vunpack.c.l.b16 %v2266
    %v2336 = vunpack.c.l.b16 %v2267
    %v2337 = vunpack.c.l.b16 %v2268
    %v2338 = vunpack.c.l.b16 %v2269
    %v2339 = vunpack.c.l.b16 %v2270
    %v2340 = vunpack.c.l.b16 %v2271
    %v2341 = vunpack.c.l.b16 %v2272
    %v2342 = vunpack.c.l.b16 %v2273
    %v2343 = vunpack.c.l.b16 %v2274
    %v2344 = vunpack.c.l.b16 %v2275
    %v2345 = vunpack.c.l.b16 %v2276
    %v2346 = vunpack.c.l.b16 %v2277
    %v2347 = vunpack.c.l.b16 %v2278
    %v2348 = vunpack.c.l.b16 %v2279
    %v2349 = vunpack.c.l.b16 %v2280
    %v2350 = vunpack.c.l.b16 %v2281
    %v2351 = vunpack.c.l.b16 %v2282
    %v2352 = vunpack.c.l.b16 %v2283
    %v2353 = vunpack.c.l.b16 %v2284
    %v2354 = vunpack.c.l.b16 %v2285
    %v2355 = vunpack.c.l.b16 %v2286
    %v2356 = vunpack.c.l.b16 %v2287
    %v2357 = vunpack.c.l.b16 %v2288
    %v2358 = vunpack.c.l.b16 %v2289
    %v2359 = vunpack.c.l.b16 %v2290
    %v2360 = vunpack.c.l.b16 %v2291
    %v2361 = vunpack.c.l.b16 %v2292
    %v2362 = vpack.c.b16 %v2331, %v2330
    %v2363 = vpack.c.b16 %v2333, %v2332
    %v2364 = vpack.c.b16 %v2335, %v2334
    %v2365 = vpack.c.b16 %v2337, %v2336
    %v2366 = vpack.c.b16 %v2339, %v2338
    %v2367 = vpack.c.b16 %v2341, %v2340
    %v2368 = vpack.c.b16 %v2343, %v2342
    %v2369 = vpack.c.b16 %v2345, %v2344
    %v2370 = vpack.c.b16 %v2347, %v2346
    %v2371 = vpack.c.b16 %v2349, %v2348
    %v2372 = vpack.c.b16 %v2351, %v2350
    %v2373 = vpack.c.b16 %v2353, %v2352
    %v2374 = vpack.c.b16 %v2355, %v2354
    %v2375 = vpack.c.b16 %v2357, %v2356
    %v2376 = vpack.c.b16 %v2359, %v2358
    %v2377 = vpack.c.b16 %v2361, %v2360
    %2394 = vmatpush.bf16.msra.mxu0 %v2369
    %2395 = vmatpush.bf16.msra.mxu0 %v2368
    %2396 = vmatpush.bf16.msra.mxu0 %v2367
    %2397 = vmatpush.bf16.msra.mxu0 %v2366
    %2398 = vmatpush.bf16.msra.mxu0 %v2365
    %2399 = vmatpush.bf16.msra.mxu0 %v2364
    %2400 = vmatpush.bf16.msra.mxu0 %v2363
    %2401 = vmatpush.bf16.msra.mxu0 %v2362
    %2402 = vmatmul.bf16.gmra.mxu0 %v2258
    %v2403 = vpop.f32.mrf.mxu0
    %v2404 = vadd.f32 %v2296, %v2403
    %v2405 = vpop.f32.mrf.mxu0
    %2406 = vdwg.mxu0
    %2407 = vmatpush.bf16.msra.mxu0 %v2377
    %2408 = vmatpush.bf16.msra.mxu0 %v2376
    %2409 = vmatpush.bf16.msra.mxu0 %v2375
    %2410 = vmatpush.bf16.msra.mxu0 %v2374
    %2411 = vmatpush.bf16.msra.mxu0 %v2373
    %2412 = vmatpush.bf16.msra.mxu0 %v2372
    %2413 = vmatpush.bf16.msra.mxu0 %v2371
    %2414 = vmatpush.bf16.msra.mxu0 %v2370
    %2415 = vmatmul.bf16.gmra.mxu0 %v2259
    %v2416 = vpop.f32.mrf.mxu0
    %v2417 = vadd.f32 %v2404, %v2416
    %v2418 = vpop.f32.mrf.mxu0
    %2419 = vdwg.mxu0
    %vm2420 = vcmp.eq.s32.totalorder %v1073, 1
    %v2421 = vsel %vm2420, 1, 0
    %2422 = vset.pattern.permute.xlu0 0
    %2423 = vperm.xlu0 %2422, %v2421
    %v2424 = vpop.permute.xlu0 %2423
    %vm2425 = vcmp.eq.s32.totalorder %v2424, 1
    %v2426 = vsel %vm2425, %v2417, %v1745
    %vm2427 = vcmask 523264
    %2428 = vst.msk [vmem:[%s4] sm:$0xff] %vm2427, %v2426
    // Predicated region
    $region26: #{mapping_network_forward.1} parent=1 // pred_check
      _
    $region27: #{mapping_network_forward.1} parent=1 // pred_check_branch
      %2430 = sbr.rel (0) target = $region29
    $region28: #{mapping_network_forward.1} parent=1 // pred_region
      _
    $region29: #{mapping_network_forward.1} parent=1 // pred_fallthru
      _
    // Predicated region
    $region30: #{mapping_network_forward.1} parent=1 // pred_check
      _
    $region31: #{mapping_network_forward.1} parent=1 // pred_check_branch
      %2432 = sbr.rel (0) target = $region33
    $region32: #{mapping_network_forward.1} parent=1 // pred_region
      _
    $region33: #{mapping_network_forward.1} parent=1 // pred_fallthru
      _
    %2433 = vsyncpa [#allocation3], 1
    %2434 = vsyncpa [#allocation5], 1

</llo_original>
